<compile_context>
chip_gen: v6e
topology: v6e:2x2x1
jax: 0.10.0
libtpu: 0.0.40
codegen_flags: <defaults>
</compile_context>

<pallas_src>
import math
import functools

import jax
import jax.numpy as jnp
import numpy as np
from jax.experimental import pallas as pl
from jax.experimental.pallas import tpu as pltpu


# --------------------------- Fused MHA kernel ------------------------------ #
def _fused_mha_kernel(q_ref, k_ref, v_ref, bias_ref,
                      wq_ref, bq_ref, wk_ref, bk_ref, wv_ref, bv_ref,
                      wo_ref, bo_ref, o_ref, *, h):
    f32 = jnp.float32
    bf16 = jnp.bfloat16
    tq, D = q_ref.shape          # query tile
    S, _ = k_ref.shape           # full key/value length

    def proj_heads(x_ref, w_ref, b_ref):
        # x: (T, D) -> (h, T, D) broadcast; w: (h, D, d_k) bf16 -> (h, T, d_k) f32.
        # Head-batched MXU matmul; contraction over the full D dimension.
        t = x_ref.shape[0]
        x = jnp.broadcast_to(x_ref[...].astype(bf16)[None], (h, t, D))
        y = jax.lax.dot_general(x, w_ref[...],
                                (((2,), (1,)), ((0,), (0,))),
                                preferred_element_type=f32)
        return y + b_ref[...].astype(f32)          # (h, 1, d_k) broadcasts over T

    # 1/sqrt(d_k) is already folded into wq/bq by the wrapper.
    q = proj_heads(q_ref, wq_ref, bq_ref)          # (h, tq, d_k)
    k = proj_heads(k_ref, wk_ref, bk_ref)          # (h, S,  d_k)
    v = proj_heads(v_ref, wv_ref, bv_ref)          # (h, S,  d_k)

    # scores = q @ k^T, head-batched, contracting d_k (trans_b semantics).
    s = jax.lax.dot_general(q.astype(bf16), k.astype(bf16),
                            (((2,), (2,)), ((0,), (0,))),
                            preferred_element_type=f32)        # (h, tq, S)
    # Additive mask bias (0 / -1e9); matches masked_fill(-1e9) up to exp() noise.
    s = s + bias_ref[...].astype(f32)[None]

    # Numerically-stable softmax over the key axis (all f32 on the VPU/EUP).
    s = s - jnp.max(s, axis=-1, keepdims=True)
    p = jnp.exp(s)
    p = p * pl.reciprocal(jnp.sum(p, axis=-1, keepdims=True), approx=True)

    # context = p @ v, head-batched.
    ctx = jax.lax.dot_general(p.astype(bf16), v.astype(bf16),
                              (((2,), (1,)), ((0,), (0,))),
                              preferred_element_type=f32)      # (h, tq, d_k)

    # Output projection: sum_h ctx_h @ Wo_h  ->  lane-dense (tq, D), no concat.
    out_h = jax.lax.dot_general(ctx.astype(bf16), wo_ref[...],
                                (((2,), (1,)), ((0,), (0,))),
                                preferred_element_type=f32)    # (h, tq, D)
    out = jnp.sum(out_h, axis=0) + bo_ref[...].astype(f32)     # (tq, D)
    o_ref[...] = out.astype(o_ref.dtype)


# ------------------------------ Module wrapper ----------------------------- #
def multi_headed_attention(query, key, value, params, mask=None, *, h, q_tile=None):
    """query/key/value: (B, S, D); mask: (S,S) | (1,S,S) | (B,S,S) int/bool or None."""
    B, S, D = query.shape
    assert D % h == 0
    d_k = D // h
    scale = 1.0 / math.sqrt(d_k)
    (wq, bq), (wk, bk), (wv, bv), (wo, bo) = params

    tq = S if q_tile is None else q_tile
    assert S % tq == 0
    n_q = S // tq

    f32, bf16 = jnp.float32, jnp.bfloat16

    def split_in_proj(w, b, s=1.0):
        # w: (D_in, D_out) with out = head-major; -> (h, D, d_k) bf16, (h, 1, d_k) f32.
        w_h = (w.astype(f32) * s).reshape(D, h, d_k).transpose(1, 0, 2).astype(bf16)
        b_h = (b.astype(f32) * s).reshape(1, h, d_k).transpose(1, 0, 2)
        return w_h, b_h

    wq_h, bq_h = split_in_proj(wq, bq, scale)   # scale folded into the Q projection
    wk_h, bk_h = split_in_proj(wk, bk)
    wv_h, bv_h = split_in_proj(wv, bv)
    wo_h = wo.astype(f32).reshape(h, d_k, D).astype(bf16)      # rows are head-major
    bo_f = bo.astype(f32).reshape(1, D)

    # Additive mask bias, bf16 (half the DMA bytes of f32); widened in-kernel.
    # NOTE: fully-masked rows give softmax over raw scores instead of torch's
    # uniform-over--1e9; identical for causal / any mask with >=1 valid entry.
    if mask is None:
        bias = jnp.zeros((1, S, S), dtype=bf16)
    else:
        m = mask if mask.ndim == 3 else mask[None]
        bias = jnp.where(m == 0, -1e9, 0.0).astype(bf16)
    if bias.shape[0] == 1:
        bias_map = lambda b, qi: (0, qi, 0)
    else:
        bias_map = lambda b, qi: (b, qi, 0)

    kernel = functools.partial(_fused_mha_kernel, h=h)

    q_spec = pl.BlockSpec((None, tq, D), lambda b, qi: (b, qi, 0))
    kv_spec = pl.BlockSpec((None, S, D), lambda b, qi: (b, 0, 0))
    w_spec = pl.BlockSpec((h, D, d_k), lambda b, qi: (0, 0, 0))
    wb_spec = pl.BlockSpec((h, 1, d_k), lambda b, qi: (0, 0, 0))
    wo_spec = pl.BlockSpec((h, d_k, D), lambda b, qi: (0, 0, 0))
    bo_spec = pl.BlockSpec((1, D), lambda b, qi: (0, 0))

    return pl.pallas_call(
        kernel,
        out_shape=jax.ShapeDtypeStruct((B, S, D), query.dtype),
        grid=(B, n_q),
        in_specs=[
            q_spec,                                   # query tile
            kv_spec,                                  # key (full length)
            kv_spec,                                  # value (full length)
            pl.BlockSpec((None, tq, S), bias_map),    # additive mask bias (bf16)
            w_spec, wb_spec,                          # wq, bq  (scale folded in)
            w_spec, wb_spec,                          # wk, bk
            w_spec, wb_spec,                          # wv, bv
            wo_spec, bo_spec,                         # wo, bo
        ],
        out_specs=q_spec,
        compiler_params=pltpu.CompilerParams(
            dimension_semantics=("parallel", "parallel"),  # batch & q-tiles -> megacore
            vmem_limit_bytes=64 * 1024 * 1024,             # sweep 64-100 MiB on v5e/v6e
        ),
    )(query, key, value, bias, wq_h, bq_h, wk_h, bk_h, wv_h, bv_h, wo_h, bo_f)


# ------------------------------ Reference & params ------------------------- #
def _reference_mha(query, key, value, params, mask, *, h):
    """Pure-JAX reference mirroring the PyTorch module (no dropout)."""
    B, S, D = query.shape
    d_k = D // h
    (wq, bq), (wk, bk), (wv, bv), (wo, bo) = params

    def proj(x, w, b):
        y = x.reshape(B * S, D) @ w + b
        return y.reshape(B, S, h, d_k).transpose(0, 2, 1, 3)   # (B, H, S, d_k)

    q, k, v = proj(query, wq, bq), proj(key, wk, bk), proj(value, wv, bv)
    scores = jnp.einsum('bhqd,bhkd->bhqk', q, k) / math.sqrt(d_k)
    if mask is not None:
        m = mask if mask.ndim == 3 else mask[None]
        scores = jnp.where(m[:, None, :, :] == 0, -1e9, scores)
    p = jax.nn.softmax(scores, axis=-1)
    x = jnp.einsum('bhqk,bhkd->bhqd', p, v)
    x = x.transpose(0, 2, 1, 3).reshape(B * S, D)
    return (x @ wo + bo).reshape(B, S, D)


def init_params(rng, d_model):
    """Deterministic synthetic params for the 4 nn.Linear(d_model, d_model) layers."""
    keys = jax.random.split(rng, 8)
    bound = 1.0 / math.sqrt(d_model)
    params = []
    for i in range(4):
        w = jax.random.uniform(keys[2 * i], (d_model, d_model),
                               minval=-bound, maxval=bound, dtype=jnp.float32)
        b = jax.random.uniform(keys[2 * i + 1], (1, d_model),
                               minval=-bound, maxval=bound, dtype=jnp.float32)
        params.append((w, b))
    return tuple(params)


if __name__ == "__main__":
    B, S, D, H = 2, 8, 32, 4  # batch, seq, d_model, heads (d_k = 8)

    root = jax.random.PRNGKey(0)
    k_p, k_q, k_k, k_v = jax.random.split(root, 4)

    params = init_params(k_p, D)
    query = jax.random.normal(k_q, (B, S, D), dtype=jnp.float32)
    key_t = jax.random.normal(k_k, (B, S, D), dtype=jnp.float32)
    value = jax.random.normal(k_v, (B, S, D), dtype=jnp.float32)

    # causal mask (identical across batch -> passed as (S, S), used as (1, S, S))
    mask = jnp.tril(jnp.ones((S, S), dtype=jnp.int32))

    out = multi_headed_attention(query, key_t, value, params, mask=mask, h=H)
    jax.block_until_ready(out)
    assert out.shape == (B, S, D)

    ref = _reference_mha(query, key_t, value, params, mask, h=H)
    np.testing.assert_allclose(np.asarray(out), np.asarray(ref), rtol=5e-2, atol=5e-2)

    print("KERNEL_OK")
</pallas_src>

<mosaic_0001>
module attributes {stable_mosaic.version = 11 : i64} {
  func.func @_fused_mha_kernel(%arg0: i32, %arg1: i32, %arg2: memref<1x8x32xf32, #tpu.memory_space<vmem>>, %arg3: memref<1x8x32xf32, #tpu.memory_space<vmem>>, %arg4: memref<1x8x32xf32, #tpu.memory_space<vmem>>, %arg5: memref<1x8x8xbf16, #tpu.memory_space<vmem>>, %arg6: memref<4x32x8xbf16, #tpu.memory_space<vmem>>, %arg7: memref<4x1x8xf32, #tpu.memory_space<vmem>>, %arg8: memref<4x32x8xbf16, #tpu.memory_space<vmem>>, %arg9: memref<4x1x8xf32, #tpu.memory_space<vmem>>, %arg10: memref<4x32x8xbf16, #tpu.memory_space<vmem>>, %arg11: memref<4x1x8xf32, #tpu.memory_space<vmem>>, %arg12: memref<4x8x32xbf16, #tpu.memory_space<vmem>>, %arg13: memref<1x32xf32, #tpu.memory_space<vmem>>, %arg14: memref<1x8x32xf32, #tpu.memory_space<vmem>>) attributes {dimension_semantics = [#tpu.dimension_semantics<parallel>, #tpu.dimension_semantics<parallel>], iteration_bounds = array<i64: 2, 1>, scalar_prefetch = 0 : i64, scratch_operands = 0 : i64, tpu.core_type = #tpu.core_type<tc>, window_params = [{transform_indices = @transform_0, window_bounds = array<i64: 1, 8, 32>}, {transform_indices = @transform_1, window_bounds = array<i64: 1, 8, 32>}, {transform_indices = @transform_2, window_bounds = array<i64: 1, 8, 32>}, {transform_indices = @transform_3, window_bounds = array<i64: 1, 8, 8>}, {pipeline_mode = #tpu.pipeline_mode<synchronous>, transform_indices = @transform_4, window_bounds = array<i64: 4, 32, 8>}, {pipeline_mode = #tpu.pipeline_mode<synchronous>, transform_indices = @transform_5, window_bounds = array<i64: 4, 1, 8>}, {pipeline_mode = #tpu.pipeline_mode<synchronous>, transform_indices = @transform_6, window_bounds = array<i64: 4, 32, 8>}, {pipeline_mode = #tpu.pipeline_mode<synchronous>, transform_indices = @transform_7, window_bounds = array<i64: 4, 1, 8>}, {pipeline_mode = #tpu.pipeline_mode<synchronous>, transform_indices = @transform_8, window_bounds = array<i64: 4, 32, 8>}, {pipeline_mode = #tpu.pipeline_mode<synchronous>, transform_indices = @transform_9, window_bounds = array<i64: 4, 1, 8>}, {pipeline_mode = #tpu.pipeline_mode<synchronous>, transform_indices = @transform_10, window_bounds = array<i64: 4, 8, 32>}, {pipeline_mode = #tpu.pipeline_mode<synchronous>, transform_indices = @transform_11, window_bounds = array<i64: 1, 32>}, {transform_indices = @transform_12, window_bounds = array<i64: 1, 8, 32>}]} {
    %c0 = arith.constant 0 : index
    %c0_0 = arith.constant 0 : index
    %c0_1 = arith.constant 0 : index
    %0 = vector.load %arg2[%c0, %c0_0, %c0_1] : memref<1x8x32xf32, #tpu.memory_space<vmem>>, vector<1x8x32xf32>
    %1 = vector.shape_cast %0 : vector<1x8x32xf32> to vector<8x32xf32>
    %2 = arith.truncf %1 : vector<8x32xf32> to vector<8x32xbf16>
    %3 = vector.shape_cast %2 : vector<8x32xbf16> to vector<1x8x32xbf16>
    %4 = vector.shape_cast %3 : vector<1x8x32xbf16> to vector<1x8x32xbf16>
    %5 = vector.broadcast %4 : vector<1x8x32xbf16> to vector<4x8x32xbf16>
    %c0_2 = arith.constant 0 : index
    %c0_3 = arith.constant 0 : index
    %c0_4 = arith.constant 0 : index
    %6 = vector.load %arg6[%c0_2, %c0_3, %c0_4] : memref<4x32x8xbf16, #tpu.memory_space<vmem>>, vector<4x32x8xbf16>
    %cst = arith.constant dense<0.000000e+00> : vector<4x8x8xf32>
    %7 = tpu.matmul %5, %6, %cst {dimension_numbers = #tpu.dot_dimension_numbers<[2], [1], [1], [2], [0, 0, 0, 1, 1, 2], [0], [0]>} : vector<4x8x32xbf16>, vector<4x32x8xbf16>, vector<4x8x8xf32> -> vector<4x8x8xf32>
    %c0_5 = arith.constant 0 : index
    %c0_6 = arith.constant 0 : index
    %c0_7 = arith.constant 0 : index
    %8 = vector.load %arg7[%c0_5, %c0_6, %c0_7] : memref<4x1x8xf32, #tpu.memory_space<vmem>>, vector<4x1x8xf32>
    %9 = vector.broadcast %8 : vector<4x1x8xf32> to vector<4x8x8xf32>
    %10 = arith.addf %7, %9 : vector<4x8x8xf32>
    %c0_8 = arith.constant 0 : index
    %c0_9 = arith.constant 0 : index
    %c0_10 = arith.constant 0 : index
    %11 = vector.load %arg3[%c0_8, %c0_9, %c0_10] : memref<1x8x32xf32, #tpu.memory_space<vmem>>, vector<1x8x32xf32>
    %12 = vector.shape_cast %11 : vector<1x8x32xf32> to vector<8x32xf32>
    %13 = arith.truncf %12 : vector<8x32xf32> to vector<8x32xbf16>
    %14 = vector.shape_cast %13 : vector<8x32xbf16> to vector<1x8x32xbf16>
    %15 = vector.shape_cast %14 : vector<1x8x32xbf16> to vector<1x8x32xbf16>
    %16 = vector.broadcast %15 : vector<1x8x32xbf16> to vector<4x8x32xbf16>
    %c0_11 = arith.constant 0 : index
    %c0_12 = arith.constant 0 : index
    %c0_13 = arith.constant 0 : index
    %17 = vector.load %arg8[%c0_11, %c0_12, %c0_13] : memref<4x32x8xbf16, #tpu.memory_space<vmem>>, vector<4x32x8xbf16>
    %cst_14 = arith.constant dense<0.000000e+00> : vector<4x8x8xf32>
    %18 = tpu.matmul %16, %17, %cst_14 {dimension_numbers = #tpu.dot_dimension_numbers<[2], [1], [1], [2], [0, 0, 0, 1, 1, 2], [0], [0]>} : vector<4x8x32xbf16>, vector<4x32x8xbf16>, vector<4x8x8xf32> -> vector<4x8x8xf32>
    %c0_15 = arith.constant 0 : index
    %c0_16 = arith.constant 0 : index
    %c0_17 = arith.constant 0 : index
    %19 = vector.load %arg9[%c0_15, %c0_16, %c0_17] : memref<4x1x8xf32, #tpu.memory_space<vmem>>, vector<4x1x8xf32>
    %20 = vector.broadcast %19 : vector<4x1x8xf32> to vector<4x8x8xf32>
    %21 = arith.addf %18, %20 : vector<4x8x8xf32>
    %c0_18 = arith.constant 0 : index
    %c0_19 = arith.constant 0 : index
    %c0_20 = arith.constant 0 : index
    %22 = vector.load %arg4[%c0_18, %c0_19, %c0_20] : memref<1x8x32xf32, #tpu.memory_space<vmem>>, vector<1x8x32xf32>
    %23 = vector.shape_cast %22 : vector<1x8x32xf32> to vector<8x32xf32>
    %24 = arith.truncf %23 : vector<8x32xf32> to vector<8x32xbf16>
    %25 = vector.shape_cast %24 : vector<8x32xbf16> to vector<1x8x32xbf16>
    %26 = vector.shape_cast %25 : vector<1x8x32xbf16> to vector<1x8x32xbf16>
    %27 = vector.broadcast %26 : vector<1x8x32xbf16> to vector<4x8x32xbf16>
    %c0_21 = arith.constant 0 : index
    %c0_22 = arith.constant 0 : index
    %c0_23 = arith.constant 0 : index
    %28 = vector.load %arg10[%c0_21, %c0_22, %c0_23] : memref<4x32x8xbf16, #tpu.memory_space<vmem>>, vector<4x32x8xbf16>
    %cst_24 = arith.constant dense<0.000000e+00> : vector<4x8x8xf32>
    %29 = tpu.matmul %27, %28, %cst_24 {dimension_numbers = #tpu.dot_dimension_numbers<[2], [1], [1], [2], [0, 0, 0, 1, 1, 2], [0], [0]>} : vector<4x8x32xbf16>, vector<4x32x8xbf16>, vector<4x8x8xf32> -> vector<4x8x8xf32>
    %c0_25 = arith.constant 0 : index
    %c0_26 = arith.constant 0 : index
    %c0_27 = arith.constant 0 : index
    %30 = vector.load %arg11[%c0_25, %c0_26, %c0_27] : memref<4x1x8xf32, #tpu.memory_space<vmem>>, vector<4x1x8xf32>
    %31 = vector.broadcast %30 : vector<4x1x8xf32> to vector<4x8x8xf32>
    %32 = arith.addf %29, %31 : vector<4x8x8xf32>
    %33 = arith.truncf %10 : vector<4x8x8xf32> to vector<4x8x8xbf16>
    %34 = arith.truncf %21 : vector<4x8x8xf32> to vector<4x8x8xbf16>
    %cst_28 = arith.constant dense<0.000000e+00> : vector<4x8x8xf32>
    %35 = tpu.matmul %33, %34, %cst_28 {dimension_numbers = #tpu.dot_dimension_numbers<[2], [2], [1], [1], [0, 0, 0, 1, 1, 1], [0], [0]>} : vector<4x8x8xbf16>, vector<4x8x8xbf16>, vector<4x8x8xf32> -> vector<4x8x8xf32>
    %c0_29 = arith.constant 0 : index
    %c0_30 = arith.constant 0 : index
    %c0_31 = arith.constant 0 : index
    %36 = vector.load %arg5[%c0_29, %c0_30, %c0_31] : memref<1x8x8xbf16, #tpu.memory_space<vmem>>, vector<1x8x8xbf16>
    %37 = vector.shape_cast %36 : vector<1x8x8xbf16> to vector<8x8xbf16>
    %38 = arith.extf %37 : vector<8x8xbf16> to vector<8x8xf32>
    %39 = vector.shape_cast %38 : vector<8x8xf32> to vector<1x8x8xf32>
    %40 = vector.broadcast %39 : vector<1x8x8xf32> to vector<4x8x8xf32>
    %41 = arith.addf %35, %40 : vector<4x8x8xf32>
    %cst_32 = arith.constant dense<0xFF800000> : vector<4x8xf32>
    %42 = vector.multi_reduction <maximumf>, %41, %cst_32 [2] : vector<4x8x8xf32> to vector<4x8xf32>
    %43 = vector.shape_cast %42 : vector<4x8xf32> to vector<4x8x1xf32>
    %44 = vector.broadcast %43 : vector<4x8x1xf32> to vector<4x8x8xf32>
    %45 = arith.subf %41, %44 : vector<4x8x8xf32>
    %46 = math.exp %45 : vector<4x8x8xf32>
    %cst_33 = arith.constant dense<0.000000e+00> : vector<4x8xf32>
    %47 = vector.multi_reduction <add>, %46, %cst_33 [2] : vector<4x8x8xf32> to vector<4x8xf32>
    %48 = vector.shape_cast %47 : vector<4x8xf32> to vector<4x8x1xf32>
    %49 = tpu.reciprocal %48 {approx = true} : vector<4x8x1xf32> -> vector<4x8x1xf32>
    %50 = vector.broadcast %49 : vector<4x8x1xf32> to vector<4x8x8xf32>
    %51 = arith.mulf %46, %50 : vector<4x8x8xf32>
    %52 = arith.truncf %51 : vector<4x8x8xf32> to vector<4x8x8xbf16>
    %53 = arith.truncf %32 : vector<4x8x8xf32> to vector<4x8x8xbf16>
    %cst_34 = arith.constant dense<0.000000e+00> : vector<4x8x8xf32>
    %54 = tpu.matmul %52, %53, %cst_34 {dimension_numbers = #tpu.dot_dimension_numbers<[2], [1], [1], [2], [0, 0, 0, 1, 1, 2], [0], [0]>} : vector<4x8x8xbf16>, vector<4x8x8xbf16>, vector<4x8x8xf32> -> vector<4x8x8xf32>
    %55 = arith.truncf %54 : vector<4x8x8xf32> to vector<4x8x8xbf16>
    %c0_35 = arith.constant 0 : index
    %c0_36 = arith.constant 0 : index
    %c0_37 = arith.constant 0 : index
    %56 = vector.load %arg12[%c0_35, %c0_36, %c0_37] : memref<4x8x32xbf16, #tpu.memory_space<vmem>>, vector<4x8x32xbf16>
    %cst_38 = arith.constant dense<0.000000e+00> : vector<4x8x32xf32>
    %57 = tpu.matmul %55, %56, %cst_38 {dimension_numbers = #tpu.dot_dimension_numbers<[2], [1], [1], [2], [0, 0, 0, 1, 1, 2], [0], [0]>} : vector<4x8x8xbf16>, vector<4x8x32xbf16>, vector<4x8x32xf32> -> vector<4x8x32xf32>
    %cst_39 = arith.constant dense<0.000000e+00> : vector<8x32xf32>
    %58 = vector.multi_reduction <add>, %57, %cst_39 [0] : vector<4x8x32xf32> to vector<8x32xf32>
    %c0_40 = arith.constant 0 : index
    %c0_41 = arith.constant 0 : index
    %59 = vector.load %arg13[%c0_40, %c0_41] : memref<1x32xf32, #tpu.memory_space<vmem>>, vector<1x32xf32>
    %60 = vector.broadcast %59 : vector<1x32xf32> to vector<8x32xf32>
    %61 = arith.addf %58, %60 : vector<8x32xf32>
    %c0_42 = arith.constant 0 : index
    %c0_43 = arith.constant 0 : index
    %c0_44 = arith.constant 0 : index
    %62 = vector.load %arg14[%c0_42, %c0_43, %c0_44] : memref<1x8x32xf32, #tpu.memory_space<vmem>>, vector<1x8x32xf32>
    %63 = vector.shape_cast %62 : vector<1x8x32xf32> to vector<8x32xf32>
    %64 = vector.shape_cast %61 : vector<8x32xf32> to vector<1x8x32xf32>
    tpu.vector_store %arg14[%c0_42, %c0_43, %c0_44], %64 {strides = array<i32>} : memref<1x8x32xf32, #tpu.memory_space<vmem>>, vector<1x8x32xf32>,
    return
  }
  func.func @transform_0(%arg0: i32, %arg1: i32) -> (i32, i32, i32) {
    %c0_i32 = arith.constant 0 : i32
    %c0_i32_0 = arith.constant 0 : i32
    return %arg0, %arg1, %c0_i32 : i32, i32, i32
  }
  func.func @transform_1(%arg0: i32, %arg1: i32) -> (i32, i32, i32) {
    %c0_i32 = arith.constant 0 : i32
    %c0_i32_0 = arith.constant 0 : i32
    %c0_i32_1 = arith.constant 0 : i32
    return %arg0, %c0_i32, %c0_i32_0 : i32, i32, i32
  }
  func.func @transform_2(%arg0: i32, %arg1: i32) -> (i32, i32, i32) {
    %c0_i32 = arith.constant 0 : i32
    %c0_i32_0 = arith.constant 0 : i32
    %c0_i32_1 = arith.constant 0 : i32
    return %arg0, %c0_i32, %c0_i32_0 : i32, i32, i32
  }
  func.func @transform_3(%arg0: i32, %arg1: i32) -> (i32, i32, i32) {
    %c0_i32 = arith.constant 0 : i32
    %c0_i32_0 = arith.constant 0 : i32
    %c0_i32_1 = arith.constant 0 : i32
    return %c0_i32, %arg1, %c0_i32_0 : i32, i32, i32
  }
  func.func @transform_4(%arg0: i32, %arg1: i32) -> (i32, i32, i32) {
    %c0_i32 = arith.constant 0 : i32
    %c0_i32_0 = arith.constant 0 : i32
    %c0_i32_1 = arith.constant 0 : i32
    %c0_i32_2 = arith.constant 0 : i32
    return %c0_i32, %c0_i32_0, %c0_i32_1 : i32, i32, i32
  }
  func.func @transform_5(%arg0: i32, %arg1: i32) -> (i32, i32, i32) {
    %c0_i32 = arith.constant 0 : i32
    %c0_i32_0 = arith.constant 0 : i32
    %c0_i32_1 = arith.constant 0 : i32
    %c0_i32_2 = arith.constant 0 : i32
    return %c0_i32, %c0_i32_0, %c0_i32_1 : i32, i32, i32
  }
  func.func @transform_6(%arg0: i32, %arg1: i32) -> (i32, i32, i32) {
    %c0_i32 = arith.constant 0 : i32
    %c0_i32_0 = arith.constant 0 : i32
    %c0_i32_1 = arith.constant 0 : i32
    %c0_i32_2 = arith.constant 0 : i32
    return %c0_i32, %c0_i32_0, %c0_i32_1 : i32, i32, i32
  }
  func.func @transform_7(%arg0: i32, %arg1: i32) -> (i32, i32, i32) {
    %c0_i32 = arith.constant 0 : i32
    %c0_i32_0 = arith.constant 0 : i32
    %c0_i32_1 = arith.constant 0 : i32
    %c0_i32_2 = arith.constant 0 : i32
    return %c0_i32, %c0_i32_0, %c0_i32_1 : i32, i32, i32
  }
  func.func @transform_8(%arg0: i32, %arg1: i32) -> (i32, i32, i32) {
    %c0_i32 = arith.constant 0 : i32
    %c0_i32_0 = arith.constant 0 : i32
    %c0_i32_1 = arith.constant 0 : i32
    %c0_i32_2 = arith.constant 0 : i32
    return %c0_i32, %c0_i32_0, %c0_i32_1 : i32, i32, i32
  }
  func.func @transform_9(%arg0: i32, %arg1: i32) -> (i32, i32, i32) {
    %c0_i32 = arith.constant 0 : i32
    %c0_i32_0 = arith.constant 0 : i32
    %c0_i32_1 = arith.constant 0 : i32
    %c0_i32_2 = arith.constant 0 : i32
    return %c0_i32, %c0_i32_0, %c0_i32_1 : i32, i32, i32
  }
  func.func @transform_10(%arg0: i32, %arg1: i32) -> (i32, i32, i32) {
    %c0_i32 = arith.constant 0 : i32
    %c0_i32_0 = arith.constant 0 : i32
    %c0_i32_1 = arith.constant 0 : i32
    %c0_i32_2 = arith.constant 0 : i32
    return %c0_i32, %c0_i32_0, %c0_i32_1 : i32, i32, i32
  }
  func.func @transform_11(%arg0: i32, %arg1: i32) -> (i32, i32) {
    %c0_i32 = arith.constant 0 : i32
    %c0_i32_0 = arith.constant 0 : i32
    %c0_i32_1 = arith.constant 0 : i32
    return %c0_i32, %c0_i32_0 : i32, i32
  }
  func.func @transform_12(%arg0: i32, %arg1: i32) -> (i32, i32, i32) {
    %c0_i32 = arith.constant 0 : i32
    %c0_i32_0 = arith.constant 0 : i32
    return %arg0, %arg1, %c0_i32 : i32, i32, i32
  }
}

</mosaic_0001>

<llo_original>
// kernel: tpu_custom_call.1
$region0: #{tpu_custom_call.1}
  #allocation0 [shape = 'u32[]', space=smem, size = 0x4, offset = 0x4, fixed_abs, tag = 'smem constant byte address 0x4 - core index']
  #allocation1 [shape = 'u32[144,128]{1,0:T(1,128)}', space=vmem, size = 0x12000, scoped, tag = 'internal scratch']
  %s0 = inlined_call_operand.vmem [shape: f32[2,8,32], index: 0, kind: input, shape index: {}]
  %s1 = inlined_call_operand.vmem [shape: f32[2,8,32], index: 1, kind: input, shape index: {}]
  %s2 = inlined_call_operand.vmem [shape: f32[2,8,32], index: 2, kind: input, shape index: {}]
  %s3 = inlined_call_operand.vmem [shape: bf16[1,8,8], index: 3, kind: input, shape index: {}]
  %s4 = inlined_call_operand.vmem [shape: bf16[4,32,8], index: 4, kind: input, shape index: {}]
  %s5 = inlined_call_operand.vmem [shape: f32[4,1,8], index: 5, kind: input, shape index: {}]
  %s6 = inlined_call_operand.vmem [shape: bf16[4,32,8], index: 6, kind: input, shape index: {}]
  %s7 = inlined_call_operand.vmem [shape: f32[4,1,8], index: 7, kind: input, shape index: {}]
  %s8 = inlined_call_operand.vmem [shape: bf16[4,32,8], index: 8, kind: input, shape index: {}]
  %s9 = inlined_call_operand.vmem [shape: f32[4,1,8], index: 9, kind: input, shape index: {}]
  %s10 = inlined_call_operand.vmem [shape: bf16[4,8,32], index: 10, kind: input, shape index: {}]
  %s11 = inlined_call_operand.vmem [shape: f32[1,32], index: 11, kind: input, shape index: {}]
  %s12 = inlined_call_operand.hbm [shape: f32[2,8,32], index: 12, kind: output, shape index: {}]
  %s13 = sld [smem:[#allocation0]]
  $region81: #{tpu_custom_call.1} parent=0
    _
  %s15 = ssub.s32 1, %s13
  %s16 = scalar_select 0, %s15, %s13
  $region1: #{tpu_custom_call.1} parent=0
    #allocation2 [shape = 'u8[8192]{0}', space=vmem, size = 0x2000, scoped, tag = 'output window, operand 0']
    #allocation3 [shape = 's32[2]{0}', space=sflag, size = 0x8, scoped, tag = 'scoped memory for tpu_custom_call.1']
    %17 = vsyncpa [#allocation3], 0
    %s18 = scalar_lea.sflag [#allocation3], 1
    %19 = vsyncpa %s18, 0
    loop: start=0, step=1, limit=4
    $region2: #{tpu_custom_call.1} parent=1 // loop_pre_header
      _
    $region3: #{tpu_custom_call.1} parent=1 // loop_header
      %s21 = sphi 0, %s25
      %p22 = scmp.ge.s32.totalorder %s21, 4
      %s28 = sphi 0, %s40
      %s29 = sphi 0, %s36
      %s30 = sphi 0, %s28
      %s31 = sphi 0, %s29
      %s32 = sphi 0, %s30
      %s33 = sphi 0, %s31
      %s45 = sphi 0, %s47
      %s48 = sphi 0, %s45
      %s49 = sphi 0, %s48
      %s65 = sphi 0, %s49
      %s71 = sphi 0, %s73
      %s74 = sphi 0, %s71
      %s75 = sphi 0, %s74
      %s91 = sphi 0, %s75
      %s97 = sphi 0, %s99
      %s100 = sphi 0, %s97
      %s101 = sphi 0, %s100
      %s117 = sphi 0, %s101
      %s123 = sphi 0, %s125
      %s126 = sphi 0, %s123
      %s127 = sphi 0, %s126
      %s143 = sphi 0, %s127
      %s147 = sphi 0, %s147
      %s149 = sphi 0, %s147
      %s150 = sphi 0, %s149
      %s164 = sphi 0, %s150
      %s168 = sphi 0, %s168
      %s170 = sphi 0, %s168
      %s171 = sphi 0, %s170
      %s185 = sphi 0, %s171
      %s189 = sphi 0, %s189
      %s191 = sphi 0, %s189
      %s192 = sphi 0, %s191
      %s206 = sphi 0, %s192
      %s210 = sphi 0, %s210
      %s212 = sphi 0, %s210
      %s213 = sphi 0, %s212
      %s227 = sphi 0, %s213
      %s231 = sphi 0, %s231
      %s233 = sphi 0, %s231
      %s234 = sphi 0, %s233
      %s248 = sphi 0, %s234
      %s252 = sphi 0, %s252
      %s254 = sphi 0, %s252
      %s255 = sphi 0, %s254
      %s269 = sphi 0, %s255
      %s273 = sphi 0, %s273
      %s275 = sphi 0, %s273
      %s276 = sphi 0, %s275
      %s290 = sphi 0, %s276
      %s294 = sphi 0, %s294
      %s296 = sphi 0, %s294
      %s297 = sphi 0, %s296
      %s311 = sphi 0, %s297
      %s319 = sphi 0, %s321
      %s322 = sphi 0, %s319
      %s323 = sphi 0, %s322
      %s339 = sphi 0, %s323
    $region4: #{tpu_custom_call.1} parent=1 // loop_header_branch
      %24 = sbr.rel (%p22) target = $region8
    $region5: #{tpu_custom_call.1} parent=1 // loop_body
      %s26 = ssub.s32 %s21, 1
      %s27 = ssub.s32 %s21, 2
      %s34 = sadd.s32 1, %s29
      %p35 = scmp.ge.s32.totalorder %s34, 1
      %s36 = scalar_select %p35, 0, %s34
      %s37 = sadd.s32 1, %s28
      %s38 = scalar_select %p35, %s37, %s28
      %p39 = scmp.ge.s32.totalorder %s38, 2
      %s40 = scalar_select %p39, 0, %s38
      %s41 = ssub.s32 %s28, %s40
      %s42 = ssub.s32 %s29, %s36
      %s43 = sor.u32 %s41, %s42
      %p44 = scmp.eq.s32.totalorder %s43, 0
      %s46 = sadd.s32 %s45, 1
      %s47 = scalar_select %p44, %s45, %s46
      %p50 = pneg %p44
      %p51 = scmp.eq.s32.totalorder %s21, 1
      %p52 = por %p50, %p51
      %p53 = scmp.ne.s32.totalorder %s45, %s48
      %p54 = scmp.eq.s32.totalorder %s21, 0
      %p55 = por %p53, %p54
      %p56 = scmp.ne.s32.totalorder %s45, %s48
      %p57 = scmp.eq.s32.totalorder %s26, 1
      %p58 = por %p56, %p57
      %p59 = scmp.ne.s32.totalorder %s48, %s49
      %p60 = scmp.eq.s32.totalorder %s26, 0
      %p61 = por %p59, %p60
      %p62 = scmp.ne.s32.totalorder %s48, %s49
      %p63 = scmp.eq.s32.totalorder %s27, 1
      %p64 = por %p62, %p63
      %p66 = scmp.ne.s32.totalorder %s49, %s65
      %p67 = scmp.eq.s32.totalorder %s27, 0
      %p68 = por %p66, %p67
      %s69 = ssub.s32 %s28, %s40
      %p70 = scmp.eq.s32.totalorder %s69, 0
      %s72 = sadd.s32 %s71, 1
      %s73 = scalar_select %p70, %s71, %s72
      %p76 = pneg %p70
      %p77 = scmp.eq.s32.totalorder %s21, 1
      %p78 = por %p76, %p77
      %p79 = scmp.ne.s32.totalorder %s71, %s74
      %p80 = scmp.eq.s32.totalorder %s21, 0
      %p81 = por %p79, %p80
      %p82 = scmp.ne.s32.totalorder %s71, %s74
      %p83 = scmp.eq.s32.totalorder %s26, 1
      %p84 = por %p82, %p83
      %p85 = scmp.ne.s32.totalorder %s74, %s75
      %p86 = scmp.eq.s32.totalorder %s26, 0
      %p87 = por %p85, %p86
      %p88 = scmp.ne.s32.totalorder %s74, %s75
      %p89 = scmp.eq.s32.totalorder %s27, 1
      %p90 = por %p88, %p89
      %p92 = scmp.ne.s32.totalorder %s75, %s91
      %p93 = scmp.eq.s32.totalorder %s27, 0
      %p94 = por %p92, %p93
      %s95 = ssub.s32 %s28, %s40
      %p96 = scmp.eq.s32.totalorder %s95, 0
      %s98 = sadd.s32 %s97, 1
      %s99 = scalar_select %p96, %s97, %s98
      %p102 = pneg %p96
      %p103 = scmp.eq.s32.totalorder %s21, 1
      %p104 = por %p102, %p103
      %p105 = scmp.ne.s32.totalorder %s97, %s100
      %p106 = scmp.eq.s32.totalorder %s21, 0
      %p107 = por %p105, %p106
      %p108 = scmp.ne.s32.totalorder %s97, %s100
      %p109 = scmp.eq.s32.totalorder %s26, 1
      %p110 = por %p108, %p109
      %p111 = scmp.ne.s32.totalorder %s100, %s101
      %p112 = scmp.eq.s32.totalorder %s26, 0
      %p113 = por %p111, %p112
      %p114 = scmp.ne.s32.totalorder %s100, %s101
      %p115 = scmp.eq.s32.totalorder %s27, 1
      %p116 = por %p114, %p115
      %p118 = scmp.ne.s32.totalorder %s101, %s117
      %p119 = scmp.eq.s32.totalorder %s27, 0
      %p120 = por %p118, %p119
      %s121 = ssub.s32 %s29, %s36
      %p122 = scmp.eq.s32.totalorder %s121, 0
      %s124 = sadd.s32 %s123, 1
      %s125 = scalar_select %p122, %s123, %s124
      %p128 = pneg %p122
      %p129 = scmp.eq.s32.totalorder %s21, 1
      %p130 = por %p128, %p129
      %p131 = scmp.ne.s32.totalorder %s123, %s126
      %p132 = scmp.eq.s32.totalorder %s21, 0
      %p133 = por %p131, %p132
      %p134 = scmp.ne.s32.totalorder %s123, %s126
      %p135 = scmp.eq.s32.totalorder %s26, 1
      %p136 = por %p134, %p135
      %p137 = scmp.ne.s32.totalorder %s126, %s127
      %p138 = scmp.eq.s32.totalorder %s26, 0
      %p139 = por %p137, %p138
      %p140 = scmp.ne.s32.totalorder %s126, %s127
      %p141 = scmp.eq.s32.totalorder %s27, 1
      %p142 = por %p140, %p141
      %p144 = scmp.ne.s32.totalorder %s127, %s143
      %p145 = scmp.eq.s32.totalorder %s27, 0
      %p146 = por %p144, %p145
      %s148 = sadd.s32 %s147, 1
      %p151 = scmp.eq.s32.totalorder %s21, 1
      %p152 = scmp.ne.s32.totalorder %s147, %s149
      %p153 = scmp.eq.s32.totalorder %s21, 0
      %p154 = por %p152, %p153
      %p155 = scmp.ne.s32.totalorder %s147, %s149
      %p156 = scmp.eq.s32.totalorder %s26, 1
      %p157 = por %p155, %p156
      %p158 = scmp.ne.s32.totalorder %s149, %s150
      %p159 = scmp.eq.s32.totalorder %s26, 0
      %p160 = por %p158, %p159
      %p161 = scmp.ne.s32.totalorder %s149, %s150
      %p162 = scmp.eq.s32.totalorder %s27, 1
      %p163 = por %p161, %p162
      %p165 = scmp.ne.s32.totalorder %s150, %s164
      %p166 = scmp.eq.s32.totalorder %s27, 0
      %p167 = por %p165, %p166
      %s169 = sadd.s32 %s168, 1
      %p172 = scmp.eq.s32.totalorder %s21, 1
      %p173 = scmp.ne.s32.totalorder %s168, %s170
      %p174 = scmp.eq.s32.totalorder %s21, 0
      %p175 = por %p173, %p174
      %p176 = scmp.ne.s32.totalorder %s168, %s170
      %p177 = scmp.eq.s32.totalorder %s26, 1
      %p178 = por %p176, %p177
      %p179 = scmp.ne.s32.totalorder %s170, %s171
      %p180 = scmp.eq.s32.totalorder %s26, 0
      %p181 = por %p179, %p180
      %p182 = scmp.ne.s32.totalorder %s170, %s171
      %p183 = scmp.eq.s32.totalorder %s27, 1
      %p184 = por %p182, %p183
      %p186 = scmp.ne.s32.totalorder %s171, %s185
      %p187 = scmp.eq.s32.totalorder %s27, 0
      %p188 = por %p186, %p187
      %s190 = sadd.s32 %s189, 1
      %p193 = scmp.eq.s32.totalorder %s21, 1
      %p194 = scmp.ne.s32.totalorder %s189, %s191
      %p195 = scmp.eq.s32.totalorder %s21, 0
      %p196 = por %p194, %p195
      %p197 = scmp.ne.s32.totalorder %s189, %s191
      %p198 = scmp.eq.s32.totalorder %s26, 1
      %p199 = por %p197, %p198
      %p200 = scmp.ne.s32.totalorder %s191, %s192
      %p201 = scmp.eq.s32.totalorder %s26, 0
      %p202 = por %p200, %p201
      %p203 = scmp.ne.s32.totalorder %s191, %s192
      %p204 = scmp.eq.s32.totalorder %s27, 1
      %p205 = por %p203, %p204
      %p207 = scmp.ne.s32.totalorder %s192, %s206
      %p208 = scmp.eq.s32.totalorder %s27, 0
      %p209 = por %p207, %p208
      %s211 = sadd.s32 %s210, 1
      %p214 = scmp.eq.s32.totalorder %s21, 1
      %p215 = scmp.ne.s32.totalorder %s210, %s212
      %p216 = scmp.eq.s32.totalorder %s21, 0
      %p217 = por %p215, %p216
      %p218 = scmp.ne.s32.totalorder %s210, %s212
      %p219 = scmp.eq.s32.totalorder %s26, 1
      %p220 = por %p218, %p219
      %p221 = scmp.ne.s32.totalorder %s212, %s213
      %p222 = scmp.eq.s32.totalorder %s26, 0
      %p223 = por %p221, %p222
      %p224 = scmp.ne.s32.totalorder %s212, %s213
      %p225 = scmp.eq.s32.totalorder %s27, 1
      %p226 = por %p224, %p225
      %p228 = scmp.ne.s32.totalorder %s213, %s227
      %p229 = scmp.eq.s32.totalorder %s27, 0
      %p230 = por %p228, %p229
      %s232 = sadd.s32 %s231, 1
      %p235 = scmp.eq.s32.totalorder %s21, 1
      %p236 = scmp.ne.s32.totalorder %s231, %s233
      %p237 = scmp.eq.s32.totalorder %s21, 0
      %p238 = por %p236, %p237
      %p239 = scmp.ne.s32.totalorder %s231, %s233
      %p240 = scmp.eq.s32.totalorder %s26, 1
      %p241 = por %p239, %p240
      %p242 = scmp.ne.s32.totalorder %s233, %s234
      %p243 = scmp.eq.s32.totalorder %s26, 0
      %p244 = por %p242, %p243
      %p245 = scmp.ne.s32.totalorder %s233, %s234
      %p246 = scmp.eq.s32.totalorder %s27, 1
      %p247 = por %p245, %p246
      %p249 = scmp.ne.s32.totalorder %s234, %s248
      %p250 = scmp.eq.s32.totalorder %s27, 0
      %p251 = por %p249, %p250
      %s253 = sadd.s32 %s252, 1
      %p256 = scmp.eq.s32.totalorder %s21, 1
      %p257 = scmp.ne.s32.totalorder %s252, %s254
      %p258 = scmp.eq.s32.totalorder %s21, 0
      %p259 = por %p257, %p258
      %p260 = scmp.ne.s32.totalorder %s252, %s254
      %p261 = scmp.eq.s32.totalorder %s26, 1
      %p262 = por %p260, %p261
      %p263 = scmp.ne.s32.totalorder %s254, %s255
      %p264 = scmp.eq.s32.totalorder %s26, 0
      %p265 = por %p263, %p264
      %p266 = scmp.ne.s32.totalorder %s254, %s255
      %p267 = scmp.eq.s32.totalorder %s27, 1
      %p268 = por %p266, %p267
      %p270 = scmp.ne.s32.totalorder %s255, %s269
      %p271 = scmp.eq.s32.totalorder %s27, 0
      %p272 = por %p270, %p271
      %s274 = sadd.s32 %s273, 1
      %p277 = scmp.eq.s32.totalorder %s21, 1
      %p278 = scmp.ne.s32.totalorder %s273, %s275
      %p279 = scmp.eq.s32.totalorder %s21, 0
      %p280 = por %p278, %p279
      %p281 = scmp.ne.s32.totalorder %s273, %s275
      %p282 = scmp.eq.s32.totalorder %s26, 1
      %p283 = por %p281, %p282
      %p284 = scmp.ne.s32.totalorder %s275, %s276
      %p285 = scmp.eq.s32.totalorder %s26, 0
      %p286 = por %p284, %p285
      %p287 = scmp.ne.s32.totalorder %s275, %s276
      %p288 = scmp.eq.s32.totalorder %s27, 1
      %p289 = por %p287, %p288
      %p291 = scmp.ne.s32.totalorder %s276, %s290
      %p292 = scmp.eq.s32.totalorder %s27, 0
      %p293 = por %p291, %p292
      %s295 = sadd.s32 %s294, 1
      %p298 = scmp.eq.s32.totalorder %s21, 1
      %p299 = scmp.ne.s32.totalorder %s294, %s296
      %p300 = scmp.eq.s32.totalorder %s21, 0
      %p301 = por %p299, %p300
      %p302 = scmp.ne.s32.totalorder %s294, %s296
      %p303 = scmp.eq.s32.totalorder %s26, 1
      %p304 = por %p302, %p303
      %p305 = scmp.ne.s32.totalorder %s296, %s297
      %p306 = scmp.eq.s32.totalorder %s26, 0
      %p307 = por %p305, %p306
      %p308 = scmp.ne.s32.totalorder %s296, %s297
      %p309 = scmp.eq.s32.totalorder %s27, 1
      %p310 = por %p308, %p309
      %p312 = scmp.ne.s32.totalorder %s297, %s311
      %p313 = scmp.eq.s32.totalorder %s27, 0
      %p314 = por %p312, %p313
      %s315 = ssub.s32 %s28, %s40
      %s316 = ssub.s32 %s29, %s36
      %s317 = sor.u32 %s315, %s316
      %p318 = scmp.eq.s32.totalorder %s317, 0
      %s320 = sadd.s32 %s319, 1
      %s321 = scalar_select %p318, %s319, %s320
      %p324 = pneg %p318
      %p325 = scmp.eq.s32.totalorder %s21, 1
      %p326 = por %p324, %p325
      %p327 = scmp.ne.s32.totalorder %s319, %s322
      %p328 = scmp.eq.s32.totalorder %s21, 0
      %p329 = por %p327, %p328
      %p330 = scmp.ne.s32.totalorder %s319, %s322
      %p331 = scmp.eq.s32.totalorder %s26, 1
      %p332 = por %p330, %p331
      %p333 = scmp.ne.s32.totalorder %s322, %s323
      %p334 = scmp.eq.s32.totalorder %s26, 0
      %p335 = por %p333, %p334
      %p336 = scmp.ne.s32.totalorder %s322, %s323
      %p337 = scmp.eq.s32.totalorder %s27, 1
      %p338 = por %p336, %p337
      %p340 = scmp.ne.s32.totalorder %s323, %s339
      %p341 = scmp.eq.s32.totalorder %s27, 0
      %p342 = por %p340, %p341
      %p343 = scmp.le.s32.totalorder 1, %s21
      %p344 = scmp.lt.s32.totalorder %s21, 3
      %p345 = pnand %p343, %p344
      %p346 = pneg %p345
      // Predicated region
      $region9: #{tpu_custom_call.1} parent=5 // pred_check
        _
      $region10: #{tpu_custom_call.1} parent=5 // pred_check_branch
        %348 = sbr.rel (%p345) target = $region12
      $region11: #{tpu_custom_call.1} parent=5 // pred_region
        %s349 = ssub.s32 %s21, 1
        // Predicated region
        $region13: #{tpu_custom_call.1} parent=11 // pred_check
          %p350 = pneg %p139
        $region14: #{tpu_custom_call.1} parent=11 // pred_check_branch
          %352 = sbr.rel (%p350) target = $region16
        $region15: #{tpu_custom_call.1} parent=11 // pred_region
          %p353 = scmp.lt.s32.totalorder %s31, 0
          %s354 = scalar_select %p353, %s31, 0
          %s355 = smul.addr %s354, 4
          %s356 = scalar_lea.vmem %s3, %s355
        $region16: #{tpu_custom_call.1} parent=11 // pred_fallthru
          _
        // Predicated region
        $region17: #{tpu_custom_call.1} parent=11 // pred_check
          %p357 = pneg %p160
        $region18: #{tpu_custom_call.1} parent=11 // pred_check_branch
          %359 = sbr.rel (%p357) target = $region20
        $region19: #{tpu_custom_call.1} parent=11 // pred_region
          _
        $region20: #{tpu_custom_call.1} parent=11 // pred_fallthru
          _
        // Predicated region
        $region21: #{tpu_custom_call.1} parent=11 // pred_check
          %p360 = pneg %p181
        $region22: #{tpu_custom_call.1} parent=11 // pred_check_branch
          %362 = sbr.rel (%p360) target = $region24
        $region23: #{tpu_custom_call.1} parent=11 // pred_region
          _
        $region24: #{tpu_custom_call.1} parent=11 // pred_fallthru
          _
        // Predicated region
        $region25: #{tpu_custom_call.1} parent=11 // pred_check
          %p363 = pneg %p202
        $region26: #{tpu_custom_call.1} parent=11 // pred_check_branch
          %365 = sbr.rel (%p363) target = $region28
        $region27: #{tpu_custom_call.1} parent=11 // pred_region
          _
        $region28: #{tpu_custom_call.1} parent=11 // pred_fallthru
          _
        // Predicated region
        $region29: #{tpu_custom_call.1} parent=11 // pred_check
          %p366 = pneg %p223
        $region30: #{tpu_custom_call.1} parent=11 // pred_check_branch
          %368 = sbr.rel (%p366) target = $region32
        $region31: #{tpu_custom_call.1} parent=11 // pred_region
          _
        $region32: #{tpu_custom_call.1} parent=11 // pred_fallthru
          _
        // Predicated region
        $region33: #{tpu_custom_call.1} parent=11 // pred_check
          %p369 = pneg %p244
        $region34: #{tpu_custom_call.1} parent=11 // pred_check_branch
          %371 = sbr.rel (%p369) target = $region36
        $region35: #{tpu_custom_call.1} parent=11 // pred_region
          _
        $region36: #{tpu_custom_call.1} parent=11 // pred_fallthru
          _
        // Predicated region
        $region37: #{tpu_custom_call.1} parent=11 // pred_check
          %p372 = pneg %p265
        $region38: #{tpu_custom_call.1} parent=11 // pred_check_branch
          %374 = sbr.rel (%p372) target = $region40
        $region39: #{tpu_custom_call.1} parent=11 // pred_region
          _
        $region40: #{tpu_custom_call.1} parent=11 // pred_fallthru
          _
        // Predicated region
        $region41: #{tpu_custom_call.1} parent=11 // pred_check
          %p375 = pneg %p286
        $region42: #{tpu_custom_call.1} parent=11 // pred_check_branch
          %377 = sbr.rel (%p375) target = $region44
        $region43: #{tpu_custom_call.1} parent=11 // pred_region
          _
        $region44: #{tpu_custom_call.1} parent=11 // pred_fallthru
          _
        // Predicated region
        $region45: #{tpu_custom_call.1} parent=11 // pred_check
          %p378 = pneg %p307
        $region46: #{tpu_custom_call.1} parent=11 // pred_check_branch
          %380 = sbr.rel (%p378) target = $region48
        $region47: #{tpu_custom_call.1} parent=11 // pred_region
          _
        $region48: #{tpu_custom_call.1} parent=11 // pred_fallthru
          _
      $region12: #{tpu_custom_call.1} parent=5 // pred_fallthru
        _
      %p381 = scmp.lt.s32.totalorder %s21, 2
      // Predicated region
      $region49: #{tpu_custom_call.1} parent=5 // pred_check
        %p382 = pneg %p381
      $region50: #{tpu_custom_call.1} parent=5 // pred_check_branch
        %384 = sbr.rel (%p382) target = $region52
      $region51: #{tpu_custom_call.1} parent=5 // pred_region
        // Predicated region
        $region53: #{tpu_custom_call.1} parent=51 // pred_check
          %p385 = pneg %p55
        $region54: #{tpu_custom_call.1} parent=51 // pred_check_branch
          %387 = sbr.rel (%p385) target = $region56
        $region55: #{tpu_custom_call.1} parent=51 // pred_region
          %p388 = scmp.lt.s32.totalorder %s28, 1
          %s389 = scalar_select %p388, %s28, 1
          %p390 = scmp.lt.s32.totalorder %s29, 0
          %s391 = scalar_select %p390, %s29, 0
          %s392 = sadd.s32 %s391, %s389
          %s393 = smul.addr %s392, 8
          %s394 = scalar_lea.vmem %s0, %s393
        $region56: #{tpu_custom_call.1} parent=51 // pred_fallthru
          _
        // Predicated region
        $region57: #{tpu_custom_call.1} parent=51 // pred_check
          %p395 = pneg %p81
        $region58: #{tpu_custom_call.1} parent=51 // pred_check_branch
          %397 = sbr.rel (%p395) target = $region60
        $region59: #{tpu_custom_call.1} parent=51 // pred_region
          %p398 = scmp.lt.s32.totalorder %s28, 1
          %s399 = scalar_select %p398, %s28, 1
          %s400 = smul.addr %s399, 8
          %s401 = scalar_lea.vmem %s1, %s400
        $region60: #{tpu_custom_call.1} parent=51 // pred_fallthru
          _
        // Predicated region
        $region61: #{tpu_custom_call.1} parent=51 // pred_check
          %p402 = pneg %p107
        $region62: #{tpu_custom_call.1} parent=51 // pred_check_branch
          %404 = sbr.rel (%p402) target = $region64
        $region63: #{tpu_custom_call.1} parent=51 // pred_region
          %p405 = scmp.lt.s32.totalorder %s28, 1
          %s406 = scalar_select %p405, %s28, 1
          %s407 = smul.addr %s406, 8
          %s408 = scalar_lea.vmem %s2, %s407
        $region64: #{tpu_custom_call.1} parent=51 // pred_fallthru
          _
      $region52: #{tpu_custom_call.1} parent=5 // pred_fallthru
        _
      %p409 = scmp.le.s32.totalorder 1, %s21
      %p410 = scmp.lt.s32.totalorder %s21, 3
      %p411 = pnand %p409, %p410
      %p412 = pneg %p411
      // Predicated region
      $region65: #{tpu_custom_call.1} parent=5 // pred_check
        _
      $region66: #{tpu_custom_call.1} parent=5 // pred_check_branch
        %414 = sbr.rel (%p411) target = $region68
      $region67: #{tpu_custom_call.1} parent=5 // pred_region
        %s415 = ssub.s32 %s21, 1
        %p416 = scmp.lt.s32.totalorder %s30, 1
        %s417 = scalar_select %p416, %s30, 1
        %p418 = scmp.lt.s32.totalorder %s31, 0
        %s419 = scalar_select %p418, %s31, 0
        %s420 = sadd.s32 %s419, %s417
        %s421 = smul.addr %s420, 8
        %s422 = scalar_lea.vmem %s0, %s421
        %p423 = pneg %p61
        %p424 = pneg %p58
        %p425 = scmp.lt.s32.totalorder %s30, 1
        %s426 = scalar_select %p425, %s30, 1
        %s427 = smul.addr %s426, 8
        %s428 = scalar_lea.vmem %s1, %s427
        %p429 = pneg %p87
        %p430 = pneg %p84
        %p431 = scmp.lt.s32.totalorder %s30, 1
        %s432 = scalar_select %p431, %s30, 1
        %s433 = smul.addr %s432, 8
        %s434 = scalar_lea.vmem %s2, %s433
        %p435 = pneg %p113
        %p436 = pneg %p110
        %p437 = scmp.lt.s32.totalorder %s31, 0
        %s438 = scalar_select %p437, %s31, 0
        %s439 = smul.addr %s438, 4
        %s440 = scalar_lea.vmem %s3, %s439
        %p441 = pneg %p139
        %p442 = pneg %p136
        %p443 = pneg %p160
        %p444 = pneg %p157
        %p445 = pneg %p181
        %p446 = pneg %p178
        %p447 = pneg %p202
        %p448 = pneg %p199
        %p449 = pneg %p223
        %p450 = pneg %p220
        %p451 = pneg %p244
        %p452 = pneg %p241
        %p453 = pneg %p265
        %p454 = pneg %p262
        %p455 = pneg %p286
        %p456 = pneg %p283
        %p457 = pneg %p307
        %p458 = pneg %p304
        %p459 = pneg %p335
        %p460 = pneg %p332
        %s461 = sand.u32 %s322, 1
        %s462 = scalar_lea.sflag [#allocation3], %s461
        %s463 = sand.u32 %s322, 1
        %s464 = smul.addr %s463, 8
        %s465 = scalar_lea.vmem [#allocation2], %s464
        %p466 = scmp.lt.s32.totalorder %s30, 1
        %s467 = scalar_select %p466, %s30, 1
        %p468 = scmp.lt.s32.totalorder %s31, 0
        %s469 = scalar_select %p468, %s31, 0
        %s470 = sadd.s32 %s469, %s467
        %s471 = smul.addr %s470, 8
        %s472 = scalar_lea.vmem %s0, %s471
        %p473 = scmp.lt.s32.totalorder %s30, 1
        %s474 = scalar_select %p473, %s30, 1
        %s475 = smul.addr %s474, 8
        %s476 = scalar_lea.vmem %s1, %s475
        %p477 = scmp.lt.s32.totalorder %s30, 1
        %s478 = scalar_select %p477, %s30, 1
        %s479 = smul.addr %s478, 8
        %s480 = scalar_lea.vmem %s2, %s479
        %p481 = scmp.lt.s32.totalorder %s31, 0
        %s482 = scalar_select %p481, %s31, 0
        %s483 = smul.addr %s482, 4
        %s484 = scalar_lea.vmem %s3, %s483
        %v486 = vld [vmem:[%s472] sm:$0xff]
        %v487 = vpack.c.bf16 %v486, %v486
        %v488 = vld [vmem:[%s4] sm:$0xf]
        %v489 = vld [vmem:[%s4 + $0x4] sm:$0xf]
        %v490 = vld [vmem:[%s4 + $0x8] sm:$0xf]
        %v491 = vld [vmem:[%s4 + $0xc] sm:$0xf]
        %v492 = vld [vmem:[%s4 + $0x10] sm:$0xf]
        %v493 = vld [vmem:[%s4 + $0x14] sm:$0xf]
        %v494 = vld [vmem:[%s4 + $0x18] sm:$0xf]
        %v495 = vld [vmem:[%s4 + $0x1c] sm:$0xf]
        %v496 = vld [vmem:[%s4 + $0x20] sm:$0xf]
        %v497 = vld [vmem:[%s4 + $0x24] sm:$0xf]
        %v498 = vld [vmem:[%s4 + $0x28] sm:$0xf]
        %v499 = vld [vmem:[%s4 + $0x2c] sm:$0xf]
        %v500 = vld [vmem:[%s4 + $0x30] sm:$0xf]
        %v501 = vld [vmem:[%s4 + $0x34] sm:$0xf]
        %v502 = vld [vmem:[%s4 + $0x38] sm:$0xf]
        %v503 = vld [vmem:[%s4 + $0x3c] sm:$0xf]
        %v504 = vld [vmem:[%s5] sm:$0x1]
        %v505 = vld [vmem:[%s5 + $0x1] sm:$0x1]
        %v506 = vld [vmem:[%s5 + $0x2] sm:$0x1]
        %v507 = vld [vmem:[%s5 + $0x3] sm:$0x1]
        %v512 = vlaneseq
        %v513 = vshrl.u32 %v512, 7
        %v514 = vsub.s32 0, %v513
        %v515 = vrot.slane %v504, %v514
        %v516 = vlaneseq
        %v517 = vshrl.u32 %v516, 7
        %v518 = vsub.s32 0, %v517
        %v519 = vrot.slane %v505, %v518
        %v520 = vlaneseq
        %v521 = vshrl.u32 %v520, 7
        %v522 = vsub.s32 0, %v521
        %v523 = vrot.slane %v506, %v522
        %v524 = vlaneseq
        %v525 = vshrl.u32 %v524, 7
        %v526 = vsub.s32 0, %v525
        %v527 = vrot.slane %v507, %v526
        %v536 = vunpack.c.l.b16 %v488
        %v537 = vunpack.c.l.b16 %v489
        %v538 = vunpack.c.l.b16 %v490
        %v539 = vunpack.c.l.b16 %v491
        %v540 = vpack.c.b16 %v537, %v536
        %v541 = vpack.c.b16 %v539, %v538
        %vm544 = vcmask 261120
        %v546 = vsel %vm544, %v487, 0
        %548 = vmatprep.subr.bf16.mxu0 0
        %549 = vmatpush1.bf16.msra.mxu0 0
        %550 = vmatprep.subr.bf16.mxu0 0
        %551 = vmatpush1.bf16.msra.mxu0 0
        %552 = vmatprep.subr.bf16.mxu0 0
        %553 = vmatpush1.bf16.msra.mxu0 0
        %554 = vmatprep.subr.bf16.mxu0 0
        %555 = vmatpush1.bf16.msra.mxu0 0
        %556 = vmatprep.subr.bf16.mxu0 0
        %557 = vmatpush1.bf16.msra.mxu0 0
        %558 = vmatprep.subr.bf16.mxu0 0
        %559 = vmatpush1.bf16.msra.mxu0 0
        %560 = vmatprep.subr.bf16.mxu0 0
        %561 = vmatpush1.bf16.msra.mxu0 %v541
        %562 = vmatprep.subr.bf16.mxu0 0
        %563 = vmatpush1.bf16.msra.mxu0 %v540
        %564 = vmatprep.subr.bf16.mxu0 0
        %565 = vmatpush2.bf16.msra.mxu0 0
        %566 = vmatprep.subr.bf16.mxu0 0
        %567 = vmatpush2.bf16.msra.mxu0 0
        %568 = vmatprep.subr.bf16.mxu0 0
        %569 = vmatpush2.bf16.msra.mxu0 0
        %570 = vmatprep.subr.bf16.mxu0 0
        %571 = vmatpush2.bf16.msra.mxu0 0
        %572 = vmatprep.subr.bf16.mxu0 0
        %573 = vmatpush2.bf16.msra.mxu0 0
        %574 = vmatprep.subr.bf16.mxu0 0
        %575 = vmatpush2.bf16.msra.mxu0 0
        %576 = vmatprep.subr.bf16.mxu0 0
        %577 = vmatpush2.bf16.msra.mxu0 0
        %578 = vmatprep.subr.bf16.mxu0 0
        %579 = vmatpush2.bf16.msra.mxu0 0
        %580 = vmatprep.mubr.bf16.mxu0 0
        %581 = vmatmul.mubr.bf16.gmra.mxu0 %v546
        %v582 = vpop.f32.mrf.mxu0
        %v583 = vadd.f32 %v515, %v582
        %v584 = vpop.f32.mrf.mxu0
        %v585 = vpop.f32.mrf.mxu0
        %v586 = vpop.f32.mrf.mxu0
        %587 = vdwg.mxu0
        %v592 = vunpack.c.l.b16 %v492
        %v593 = vunpack.c.l.b16 %v493
        %v594 = vunpack.c.l.b16 %v494
        %v595 = vunpack.c.l.b16 %v495
        %v596 = vpack.c.b16 %v593, %v592
        %v597 = vpack.c.b16 %v595, %v594
        %600 = vmatprep.subr.bf16.mxu0 0
        %601 = vmatpush1.bf16.msra.mxu0 0
        %602 = vmatprep.subr.bf16.mxu0 0
        %603 = vmatpush1.bf16.msra.mxu0 0
        %604 = vmatprep.subr.bf16.mxu0 0
        %605 = vmatpush1.bf16.msra.mxu0 0
        %606 = vmatprep.subr.bf16.mxu0 0
        %607 = vmatpush1.bf16.msra.mxu0 0
        %608 = vmatprep.subr.bf16.mxu0 0
        %609 = vmatpush1.bf16.msra.mxu0 0
        %610 = vmatprep.subr.bf16.mxu0 0
        %611 = vmatpush1.bf16.msra.mxu0 0
        %612 = vmatprep.subr.bf16.mxu0 0
        %613 = vmatpush1.bf16.msra.mxu0 %v597
        %614 = vmatprep.subr.bf16.mxu0 0
        %615 = vmatpush1.bf16.msra.mxu0 %v596
        %616 = vmatprep.subr.bf16.mxu0 0
        %617 = vmatpush2.bf16.msra.mxu0 0
        %618 = vmatprep.subr.bf16.mxu0 0
        %619 = vmatpush2.bf16.msra.mxu0 0
        %620 = vmatprep.subr.bf16.mxu0 0
        %621 = vmatpush2.bf16.msra.mxu0 0
        %622 = vmatprep.subr.bf16.mxu0 0
        %623 = vmatpush2.bf16.msra.mxu0 0
        %624 = vmatprep.subr.bf16.mxu0 0
        %625 = vmatpush2.bf16.msra.mxu0 0
        %626 = vmatprep.subr.bf16.mxu0 0
        %627 = vmatpush2.bf16.msra.mxu0 0
        %628 = vmatprep.subr.bf16.mxu0 0
        %629 = vmatpush2.bf16.msra.mxu0 0
        %630 = vmatprep.subr.bf16.mxu0 0
        %631 = vmatpush2.bf16.msra.mxu0 0
        %632 = vmatprep.mubr.bf16.mxu0 0
        %633 = vmatmul.mubr.bf16.gmra.mxu0 %v546
        %v634 = vpop.f32.mrf.mxu0
        %v635 = vadd.f32 %v519, %v634
        %v636 = vpop.f32.mrf.mxu0
        %v637 = vpop.f32.mrf.mxu0
        %v638 = vpop.f32.mrf.mxu0
        %639 = vdwg.mxu0
        %v644 = vunpack.c.l.b16 %v496
        %v645 = vunpack.c.l.b16 %v497
        %v646 = vunpack.c.l.b16 %v498
        %v647 = vunpack.c.l.b16 %v499
        %v648 = vpack.c.b16 %v645, %v644
        %v649 = vpack.c.b16 %v647, %v646
        %652 = vmatprep.subr.bf16.mxu0 0
        %653 = vmatpush1.bf16.msra.mxu0 0
        %654 = vmatprep.subr.bf16.mxu0 0
        %655 = vmatpush1.bf16.msra.mxu0 0
        %656 = vmatprep.subr.bf16.mxu0 0
        %657 = vmatpush1.bf16.msra.mxu0 0
        %658 = vmatprep.subr.bf16.mxu0 0
        %659 = vmatpush1.bf16.msra.mxu0 0
        %660 = vmatprep.subr.bf16.mxu0 0
        %661 = vmatpush1.bf16.msra.mxu0 0
        %662 = vmatprep.subr.bf16.mxu0 0
        %663 = vmatpush1.bf16.msra.mxu0 0
        %664 = vmatprep.subr.bf16.mxu0 0
        %665 = vmatpush1.bf16.msra.mxu0 %v649
        %666 = vmatprep.subr.bf16.mxu0 0
        %667 = vmatpush1.bf16.msra.mxu0 %v648
        %668 = vmatprep.subr.bf16.mxu0 0
        %669 = vmatpush2.bf16.msra.mxu0 0
        %670 = vmatprep.subr.bf16.mxu0 0
        %671 = vmatpush2.bf16.msra.mxu0 0
        %672 = vmatprep.subr.bf16.mxu0 0
        %673 = vmatpush2.bf16.msra.mxu0 0
        %674 = vmatprep.subr.bf16.mxu0 0
        %675 = vmatpush2.bf16.msra.mxu0 0
        %676 = vmatprep.subr.bf16.mxu0 0
        %677 = vmatpush2.bf16.msra.mxu0 0
        %678 = vmatprep.subr.bf16.mxu0 0
        %679 = vmatpush2.bf16.msra.mxu0 0
        %680 = vmatprep.subr.bf16.mxu0 0
        %681 = vmatpush2.bf16.msra.mxu0 0
        %682 = vmatprep.subr.bf16.mxu0 0
        %683 = vmatpush2.bf16.msra.mxu0 0
        %684 = vmatprep.mubr.bf16.mxu0 0
        %685 = vmatmul.mubr.bf16.gmra.mxu0 %v546
        %v686 = vpop.f32.mrf.mxu0
        %v687 = vadd.f32 %v523, %v686
        %v688 = vpop.f32.mrf.mxu0
        %v689 = vpop.f32.mrf.mxu0
        %v690 = vpop.f32.mrf.mxu0
        %691 = vdwg.mxu0
        %v696 = vunpack.c.l.b16 %v500
        %v697 = vunpack.c.l.b16 %v501
        %v698 = vunpack.c.l.b16 %v502
        %v699 = vunpack.c.l.b16 %v503
        %v700 = vpack.c.b16 %v697, %v696
        %v701 = vpack.c.b16 %v699, %v698
        %704 = vmatprep.subr.bf16.mxu0 0
        %705 = vmatpush1.bf16.msra.mxu0 0
        %706 = vmatprep.subr.bf16.mxu0 0
        %707 = vmatpush1.bf16.msra.mxu0 0
        %708 = vmatprep.subr.bf16.mxu0 0
        %709 = vmatpush1.bf16.msra.mxu0 0
        %710 = vmatprep.subr.bf16.mxu0 0
        %711 = vmatpush1.bf16.msra.mxu0 0
        %712 = vmatprep.subr.bf16.mxu0 0
        %713 = vmatpush1.bf16.msra.mxu0 0
        %714 = vmatprep.subr.bf16.mxu0 0
        %715 = vmatpush1.bf16.msra.mxu0 0
        %716 = vmatprep.subr.bf16.mxu0 0
        %717 = vmatpush1.bf16.msra.mxu0 %v701
        %718 = vmatprep.subr.bf16.mxu0 0
        %719 = vmatpush1.bf16.msra.mxu0 %v700
        %720 = vmatprep.subr.bf16.mxu0 0
        %721 = vmatpush2.bf16.msra.mxu0 0
        %722 = vmatprep.subr.bf16.mxu0 0
        %723 = vmatpush2.bf16.msra.mxu0 0
        %724 = vmatprep.subr.bf16.mxu0 0
        %725 = vmatpush2.bf16.msra.mxu0 0
        %726 = vmatprep.subr.bf16.mxu0 0
        %727 = vmatpush2.bf16.msra.mxu0 0
        %728 = vmatprep.subr.bf16.mxu0 0
        %729 = vmatpush2.bf16.msra.mxu0 0
        %730 = vmatprep.subr.bf16.mxu0 0
        %731 = vmatpush2.bf16.msra.mxu0 0
        %732 = vmatprep.subr.bf16.mxu0 0
        %733 = vmatpush2.bf16.msra.mxu0 0
        %734 = vmatprep.subr.bf16.mxu0 0
        %735 = vmatpush2.bf16.msra.mxu0 0
        %736 = vmatprep.mubr.bf16.mxu0 0
        %737 = vmatmul.mubr.bf16.gmra.mxu0 %v546
        %v738 = vpop.f32.mrf.mxu0
        %v739 = vadd.f32 %v527, %v738
        %v740 = vpop.f32.mrf.mxu0
        %v741 = vpop.f32.mrf.mxu0
        %v742 = vpop.f32.mrf.mxu0
        %743 = vdwg.mxu0
        %v744 = vld [vmem:[%s476] sm:$0xff]
        %v745 = vpack.c.bf16 %v744, %v744
        %v746 = vld [vmem:[%s6] sm:$0xf]
        %v747 = vld [vmem:[%s6 + $0x4] sm:$0xf]
        %v748 = vld [vmem:[%s6 + $0x8] sm:$0xf]
        %v749 = vld [vmem:[%s6 + $0xc] sm:$0xf]
        %v750 = vld [vmem:[%s6 + $0x10] sm:$0xf]
        %v751 = vld [vmem:[%s6 + $0x14] sm:$0xf]
        %v752 = vld [vmem:[%s6 + $0x18] sm:$0xf]
        %v753 = vld [vmem:[%s6 + $0x1c] sm:$0xf]
        %v754 = vld [vmem:[%s6 + $0x20] sm:$0xf]
        %v755 = vld [vmem:[%s6 + $0x24] sm:$0xf]
        %v756 = vld [vmem:[%s6 + $0x28] sm:$0xf]
        %v757 = vld [vmem:[%s6 + $0x2c] sm:$0xf]
        %v758 = vld [vmem:[%s6 + $0x30] sm:$0xf]
        %v759 = vld [vmem:[%s6 + $0x34] sm:$0xf]
        %v760 = vld [vmem:[%s6 + $0x38] sm:$0xf]
        %v761 = vld [vmem:[%s6 + $0x3c] sm:$0xf]
        %v762 = vld [vmem:[%s7] sm:$0x1]
        %v763 = vld [vmem:[%s7 + $0x1] sm:$0x1]
        %v764 = vld [vmem:[%s7 + $0x2] sm:$0x1]
        %v765 = vld [vmem:[%s7 + $0x3] sm:$0x1]
        %v770 = vlaneseq
        %v771 = vshrl.u32 %v770, 7
        %v772 = vsub.s32 0, %v771
        %v773 = vrot.slane %v762, %v772
        %v774 = vlaneseq
        %v775 = vshrl.u32 %v774, 7
        %v776 = vsub.s32 0, %v775
        %v777 = vrot.slane %v763, %v776
        %v778 = vlaneseq
        %v779 = vshrl.u32 %v778, 7
        %v780 = vsub.s32 0, %v779
        %v781 = vrot.slane %v764, %v780
        %v782 = vlaneseq
        %v783 = vshrl.u32 %v782, 7
        %v784 = vsub.s32 0, %v783
        %v785 = vrot.slane %v765, %v784
        %v794 = vunpack.c.l.b16 %v746
        %v795 = vunpack.c.l.b16 %v747
        %v796 = vunpack.c.l.b16 %v748
        %v797 = vunpack.c.l.b16 %v749
        %v798 = vpack.c.b16 %v795, %v794
        %v799 = vpack.c.b16 %v797, %v796
        %v803 = vsel %vm544, %v745, 0
        %805 = vmatprep.subr.bf16.mxu0 0
        %806 = vmatpush1.bf16.msra.mxu0 0
        %807 = vmatprep.subr.bf16.mxu0 0
        %808 = vmatpush1.bf16.msra.mxu0 0
        %809 = vmatprep.subr.bf16.mxu0 0
        %810 = vmatpush1.bf16.msra.mxu0 0
        %811 = vmatprep.subr.bf16.mxu0 0
        %812 = vmatpush1.bf16.msra.mxu0 0
        %813 = vmatprep.subr.bf16.mxu0 0
        %814 = vmatpush1.bf16.msra.mxu0 0
        %815 = vmatprep.subr.bf16.mxu0 0
        %816 = vmatpush1.bf16.msra.mxu0 0
        %817 = vmatprep.subr.bf16.mxu0 0
        %818 = vmatpush1.bf16.msra.mxu0 %v799
        %819 = vmatprep.subr.bf16.mxu0 0
        %820 = vmatpush1.bf16.msra.mxu0 %v798
        %821 = vmatprep.subr.bf16.mxu0 0
        %822 = vmatpush2.bf16.msra.mxu0 0
        %823 = vmatprep.subr.bf16.mxu0 0
        %824 = vmatpush2.bf16.msra.mxu0 0
        %825 = vmatprep.subr.bf16.mxu0 0
        %826 = vmatpush2.bf16.msra.mxu0 0
        %827 = vmatprep.subr.bf16.mxu0 0
        %828 = vmatpush2.bf16.msra.mxu0 0
        %829 = vmatprep.subr.bf16.mxu0 0
        %830 = vmatpush2.bf16.msra.mxu0 0
        %831 = vmatprep.subr.bf16.mxu0 0
        %832 = vmatpush2.bf16.msra.mxu0 0
        %833 = vmatprep.subr.bf16.mxu0 0
        %834 = vmatpush2.bf16.msra.mxu0 0
        %835 = vmatprep.subr.bf16.mxu0 0
        %836 = vmatpush2.bf16.msra.mxu0 0
        %837 = vmatprep.mubr.bf16.mxu0 0
        %838 = vmatmul.mubr.bf16.gmra.mxu0 %v803
        %v839 = vpop.f32.mrf.mxu0
        %v840 = vadd.f32 %v773, %v839
        %v841 = vpop.f32.mrf.mxu0
        %v842 = vpop.f32.mrf.mxu0
        %v843 = vpop.f32.mrf.mxu0
        %844 = vdwg.mxu0
        %v849 = vunpack.c.l.b16 %v750
        %v850 = vunpack.c.l.b16 %v751
        %v851 = vunpack.c.l.b16 %v752
        %v852 = vunpack.c.l.b16 %v753
        %v853 = vpack.c.b16 %v850, %v849
        %v854 = vpack.c.b16 %v852, %v851
        %857 = vmatprep.subr.bf16.mxu0 0
        %858 = vmatpush1.bf16.msra.mxu0 0
        %859 = vmatprep.subr.bf16.mxu0 0
        %860 = vmatpush1.bf16.msra.mxu0 0
        %861 = vmatprep.subr.bf16.mxu0 0
        %862 = vmatpush1.bf16.msra.mxu0 0
        %863 = vmatprep.subr.bf16.mxu0 0
        %864 = vmatpush1.bf16.msra.mxu0 0
        %865 = vmatprep.subr.bf16.mxu0 0
        %866 = vmatpush1.bf16.msra.mxu0 0
        %867 = vmatprep.subr.bf16.mxu0 0
        %868 = vmatpush1.bf16.msra.mxu0 0
        %869 = vmatprep.subr.bf16.mxu0 0
        %870 = vmatpush1.bf16.msra.mxu0 %v854
        %871 = vmatprep.subr.bf16.mxu0 0
        %872 = vmatpush1.bf16.msra.mxu0 %v853
        %873 = vmatprep.subr.bf16.mxu0 0
        %874 = vmatpush2.bf16.msra.mxu0 0
        %875 = vmatprep.subr.bf16.mxu0 0
        %876 = vmatpush2.bf16.msra.mxu0 0
        %877 = vmatprep.subr.bf16.mxu0 0
        %878 = vmatpush2.bf16.msra.mxu0 0
        %879 = vmatprep.subr.bf16.mxu0 0
        %880 = vmatpush2.bf16.msra.mxu0 0
        %881 = vmatprep.subr.bf16.mxu0 0
        %882 = vmatpush2.bf16.msra.mxu0 0
        %883 = vmatprep.subr.bf16.mxu0 0
        %884 = vmatpush2.bf16.msra.mxu0 0
        %885 = vmatprep.subr.bf16.mxu0 0
        %886 = vmatpush2.bf16.msra.mxu0 0
        %887 = vmatprep.subr.bf16.mxu0 0
        %888 = vmatpush2.bf16.msra.mxu0 0
        %889 = vmatprep.mubr.bf16.mxu0 0
        %890 = vmatmul.mubr.bf16.gmra.mxu0 %v803
        %v891 = vpop.f32.mrf.mxu0
        %v892 = vadd.f32 %v777, %v891
        %v893 = vpop.f32.mrf.mxu0
        %v894 = vpop.f32.mrf.mxu0
        %v895 = vpop.f32.mrf.mxu0
        %896 = vdwg.mxu0
        %v901 = vunpack.c.l.b16 %v754
        %v902 = vunpack.c.l.b16 %v755
        %v903 = vunpack.c.l.b16 %v756
        %v904 = vunpack.c.l.b16 %v757
        %v905 = vpack.c.b16 %v902, %v901
        %v906 = vpack.c.b16 %v904, %v903
        %909 = vmatprep.subr.bf16.mxu0 0
        %910 = vmatpush1.bf16.msra.mxu0 0
        %911 = vmatprep.subr.bf16.mxu0 0
        %912 = vmatpush1.bf16.msra.mxu0 0
        %913 = vmatprep.subr.bf16.mxu0 0
        %914 = vmatpush1.bf16.msra.mxu0 0
        %915 = vmatprep.subr.bf16.mxu0 0
        %916 = vmatpush1.bf16.msra.mxu0 0
        %917 = vmatprep.subr.bf16.mxu0 0
        %918 = vmatpush1.bf16.msra.mxu0 0
        %919 = vmatprep.subr.bf16.mxu0 0
        %920 = vmatpush1.bf16.msra.mxu0 0
        %921 = vmatprep.subr.bf16.mxu0 0
        %922 = vmatpush1.bf16.msra.mxu0 %v906
        %923 = vmatprep.subr.bf16.mxu0 0
        %924 = vmatpush1.bf16.msra.mxu0 %v905
        %925 = vmatprep.subr.bf16.mxu0 0
        %926 = vmatpush2.bf16.msra.mxu0 0
        %927 = vmatprep.subr.bf16.mxu0 0
        %928 = vmatpush2.bf16.msra.mxu0 0
        %929 = vmatprep.subr.bf16.mxu0 0
        %930 = vmatpush2.bf16.msra.mxu0 0
        %931 = vmatprep.subr.bf16.mxu0 0
        %932 = vmatpush2.bf16.msra.mxu0 0
        %933 = vmatprep.subr.bf16.mxu0 0
        %934 = vmatpush2.bf16.msra.mxu0 0
        %935 = vmatprep.subr.bf16.mxu0 0
        %936 = vmatpush2.bf16.msra.mxu0 0
        %937 = vmatprep.subr.bf16.mxu0 0
        %938 = vmatpush2.bf16.msra.mxu0 0
        %939 = vmatprep.subr.bf16.mxu0 0
        %940 = vmatpush2.bf16.msra.mxu0 0
        %941 = vmatprep.mubr.bf16.mxu0 0
        %942 = vmatmul.mubr.bf16.gmra.mxu0 %v803
        %v943 = vpop.f32.mrf.mxu0
        %v944 = vadd.f32 %v781, %v943
        %v945 = vpop.f32.mrf.mxu0
        %v946 = vpop.f32.mrf.mxu0
        %v947 = vpop.f32.mrf.mxu0
        %948 = vdwg.mxu0
        %v953 = vunpack.c.l.b16 %v758
        %v954 = vunpack.c.l.b16 %v759
        %v955 = vunpack.c.l.b16 %v760
        %v956 = vunpack.c.l.b16 %v761
        %v957 = vpack.c.b16 %v954, %v953
        %v958 = vpack.c.b16 %v956, %v955
        %961 = vmatprep.subr.bf16.mxu0 0
        %962 = vmatpush1.bf16.msra.mxu0 0
        %963 = vmatprep.subr.bf16.mxu0 0
        %964 = vmatpush1.bf16.msra.mxu0 0
        %965 = vmatprep.subr.bf16.mxu0 0
        %966 = vmatpush1.bf16.msra.mxu0 0
        %967 = vmatprep.subr.bf16.mxu0 0
        %968 = vmatpush1.bf16.msra.mxu0 0
        %969 = vmatprep.subr.bf16.mxu0 0
        %970 = vmatpush1.bf16.msra.mxu0 0
        %971 = vmatprep.subr.bf16.mxu0 0
        %972 = vmatpush1.bf16.msra.mxu0 0
        %973 = vmatprep.subr.bf16.mxu0 0
        %974 = vmatpush1.bf16.msra.mxu0 %v958
        %975 = vmatprep.subr.bf16.mxu0 0
        %976 = vmatpush1.bf16.msra.mxu0 %v957
        %977 = vmatprep.subr.bf16.mxu0 0
        %978 = vmatpush2.bf16.msra.mxu0 0
        %979 = vmatprep.subr.bf16.mxu0 0
        %980 = vmatpush2.bf16.msra.mxu0 0
        %981 = vmatprep.subr.bf16.mxu0 0
        %982 = vmatpush2.bf16.msra.mxu0 0
        %983 = vmatprep.subr.bf16.mxu0 0
        %984 = vmatpush2.bf16.msra.mxu0 0
        %985 = vmatprep.subr.bf16.mxu0 0
        %986 = vmatpush2.bf16.msra.mxu0 0
        %987 = vmatprep.subr.bf16.mxu0 0
        %988 = vmatpush2.bf16.msra.mxu0 0
        %989 = vmatprep.subr.bf16.mxu0 0
        %990 = vmatpush2.bf16.msra.mxu0 0
        %991 = vmatprep.subr.bf16.mxu0 0
        %992 = vmatpush2.bf16.msra.mxu0 0
        %993 = vmatprep.mubr.bf16.mxu0 0
        %994 = vmatmul.mubr.bf16.gmra.mxu0 %v803
        %v995 = vpop.f32.mrf.mxu0
        %v996 = vadd.f32 %v785, %v995
        %v997 = vpop.f32.mrf.mxu0
        %v998 = vpop.f32.mrf.mxu0
        %v999 = vpop.f32.mrf.mxu0
        %1000 = vdwg.mxu0
        %v1001 = vld [vmem:[%s480] sm:$0xff]
        %v1002 = vpack.c.bf16 %v1001, %v1001
        %v1003 = vld [vmem:[%s8] sm:$0xf]
        %v1004 = vld [vmem:[%s8 + $0x4] sm:$0xf]
        %v1005 = vld [vmem:[%s8 + $0x8] sm:$0xf]
        %v1006 = vld [vmem:[%s8 + $0xc] sm:$0xf]
        %v1007 = vld [vmem:[%s8 + $0x10] sm:$0xf]
        %v1008 = vld [vmem:[%s8 + $0x14] sm:$0xf]
        %v1009 = vld [vmem:[%s8 + $0x18] sm:$0xf]
        %v1010 = vld [vmem:[%s8 + $0x1c] sm:$0xf]
        %v1011 = vld [vmem:[%s8 + $0x20] sm:$0xf]
        %v1012 = vld [vmem:[%s8 + $0x24] sm:$0xf]
        %v1013 = vld [vmem:[%s8 + $0x28] sm:$0xf]
        %v1014 = vld [vmem:[%s8 + $0x2c] sm:$0xf]
        %v1015 = vld [vmem:[%s8 + $0x30] sm:$0xf]
        %v1016 = vld [vmem:[%s8 + $0x34] sm:$0xf]
        %v1017 = vld [vmem:[%s8 + $0x38] sm:$0xf]
        %v1018 = vld [vmem:[%s8 + $0x3c] sm:$0xf]
        %v1019 = vld [vmem:[%s9] sm:$0x1]
        %v1020 = vld [vmem:[%s9 + $0x1] sm:$0x1]
        %v1021 = vld [vmem:[%s9 + $0x2] sm:$0x1]
        %v1022 = vld [vmem:[%s9 + $0x3] sm:$0x1]
        %v1027 = vlaneseq
        %v1028 = vshrl.u32 %v1027, 7
        %v1029 = vsub.s32 0, %v1028
        %v1030 = vrot.slane %v1019, %v1029
        %v1031 = vlaneseq
        %v1032 = vshrl.u32 %v1031, 7
        %v1033 = vsub.s32 0, %v1032
        %v1034 = vrot.slane %v1020, %v1033
        %v1035 = vlaneseq
        %v1036 = vshrl.u32 %v1035, 7
        %v1037 = vsub.s32 0, %v1036
        %v1038 = vrot.slane %v1021, %v1037
        %v1039 = vlaneseq
        %v1040 = vshrl.u32 %v1039, 7
        %v1041 = vsub.s32 0, %v1040
        %v1042 = vrot.slane %v1022, %v1041
        %v1051 = vunpack.c.l.b16 %v1003
        %v1052 = vunpack.c.l.b16 %v1004
        %v1053 = vunpack.c.l.b16 %v1005
        %v1054 = vunpack.c.l.b16 %v1006
        %v1055 = vpack.c.b16 %v1052, %v1051
        %v1056 = vpack.c.b16 %v1054, %v1053
        %v1060 = vsel %vm544, %v1002, 0
        %1062 = vmatprep.subr.bf16.mxu0 0
        %1063 = vmatpush1.bf16.msra.mxu0 0
        %1064 = vmatprep.subr.bf16.mxu0 0
        %1065 = vmatpush1.bf16.msra.mxu0 0
        %1066 = vmatprep.subr.bf16.mxu0 0
        %1067 = vmatpush1.bf16.msra.mxu0 0
        %1068 = vmatprep.subr.bf16.mxu0 0
        %1069 = vmatpush1.bf16.msra.mxu0 0
        %1070 = vmatprep.subr.bf16.mxu0 0
        %1071 = vmatpush1.bf16.msra.mxu0 0
        %1072 = vmatprep.subr.bf16.mxu0 0
        %1073 = vmatpush1.bf16.msra.mxu0 0
        %1074 = vmatprep.subr.bf16.mxu0 0
        %1075 = vmatpush1.bf16.msra.mxu0 %v1056
        %1076 = vmatprep.subr.bf16.mxu0 0
        %1077 = vmatpush1.bf16.msra.mxu0 %v1055
        %1078 = vmatprep.subr.bf16.mxu0 0
        %1079 = vmatpush2.bf16.msra.mxu0 0
        %1080 = vmatprep.subr.bf16.mxu0 0
        %1081 = vmatpush2.bf16.msra.mxu0 0
        %1082 = vmatprep.subr.bf16.mxu0 0
        %1083 = vmatpush2.bf16.msra.mxu0 0
        %1084 = vmatprep.subr.bf16.mxu0 0
        %1085 = vmatpush2.bf16.msra.mxu0 0
        %1086 = vmatprep.subr.bf16.mxu0 0
        %1087 = vmatpush2.bf16.msra.mxu0 0
        %1088 = vmatprep.subr.bf16.mxu0 0
        %1089 = vmatpush2.bf16.msra.mxu0 0
        %1090 = vmatprep.subr.bf16.mxu0 0
        %1091 = vmatpush2.bf16.msra.mxu0 0
        %1092 = vmatprep.subr.bf16.mxu0 0
        %1093 = vmatpush2.bf16.msra.mxu0 0
        %1094 = vmatprep.mubr.bf16.mxu0 0
        %1095 = vmatmul.mubr.bf16.gmra.mxu0 %v1060
        %v1096 = vpop.f32.mrf.mxu0
        %v1097 = vadd.f32 %v1030, %v1096
        %v1098 = vpop.f32.mrf.mxu0
        %v1099 = vpop.f32.mrf.mxu0
        %v1100 = vpop.f32.mrf.mxu0
        %1101 = vdwg.mxu0
        %v1106 = vunpack.c.l.b16 %v1007
        %v1107 = vunpack.c.l.b16 %v1008
        %v1108 = vunpack.c.l.b16 %v1009
        %v1109 = vunpack.c.l.b16 %v1010
        %v1110 = vpack.c.b16 %v1107, %v1106
        %v1111 = vpack.c.b16 %v1109, %v1108
        %1114 = vmatprep.subr.bf16.mxu0 0
        %1115 = vmatpush1.bf16.msra.mxu0 0
        %1116 = vmatprep.subr.bf16.mxu0 0
        %1117 = vmatpush1.bf16.msra.mxu0 0
        %1118 = vmatprep.subr.bf16.mxu0 0
        %1119 = vmatpush1.bf16.msra.mxu0 0
        %1120 = vmatprep.subr.bf16.mxu0 0
        %1121 = vmatpush1.bf16.msra.mxu0 0
        %1122 = vmatprep.subr.bf16.mxu0 0
        %1123 = vmatpush1.bf16.msra.mxu0 0
        %1124 = vmatprep.subr.bf16.mxu0 0
        %1125 = vmatpush1.bf16.msra.mxu0 0
        %1126 = vmatprep.subr.bf16.mxu0 0
        %1127 = vmatpush1.bf16.msra.mxu0 %v1111
        %1128 = vmatprep.subr.bf16.mxu0 0
        %1129 = vmatpush1.bf16.msra.mxu0 %v1110
        %1130 = vmatprep.subr.bf16.mxu0 0
        %1131 = vmatpush2.bf16.msra.mxu0 0
        %1132 = vmatprep.subr.bf16.mxu0 0
        %1133 = vmatpush2.bf16.msra.mxu0 0
        %1134 = vmatprep.subr.bf16.mxu0 0
        %1135 = vmatpush2.bf16.msra.mxu0 0
        %1136 = vmatprep.subr.bf16.mxu0 0
        %1137 = vmatpush2.bf16.msra.mxu0 0
        %1138 = vmatprep.subr.bf16.mxu0 0
        %1139 = vmatpush2.bf16.msra.mxu0 0
        %1140 = vmatprep.subr.bf16.mxu0 0
        %1141 = vmatpush2.bf16.msra.mxu0 0
        %1142 = vmatprep.subr.bf16.mxu0 0
        %1143 = vmatpush2.bf16.msra.mxu0 0
        %1144 = vmatprep.subr.bf16.mxu0 0
        %1145 = vmatpush2.bf16.msra.mxu0 0
        %1146 = vmatprep.mubr.bf16.mxu0 0
        %1147 = vmatmul.mubr.bf16.gmra.mxu0 %v1060
        %v1148 = vpop.f32.mrf.mxu0
        %v1149 = vadd.f32 %v1034, %v1148
        %v1150 = vpop.f32.mrf.mxu0
        %v1151 = vpop.f32.mrf.mxu0
        %v1152 = vpop.f32.mrf.mxu0
        %1153 = vdwg.mxu0
        %v1158 = vunpack.c.l.b16 %v1011
        %v1159 = vunpack.c.l.b16 %v1012
        %v1160 = vunpack.c.l.b16 %v1013
        %v1161 = vunpack.c.l.b16 %v1014
        %v1162 = vpack.c.b16 %v1159, %v1158
        %v1163 = vpack.c.b16 %v1161, %v1160
        %1166 = vmatprep.subr.bf16.mxu0 0
        %1167 = vmatpush1.bf16.msra.mxu0 0
        %1168 = vmatprep.subr.bf16.mxu0 0
        %1169 = vmatpush1.bf16.msra.mxu0 0
        %1170 = vmatprep.subr.bf16.mxu0 0
        %1171 = vmatpush1.bf16.msra.mxu0 0
        %1172 = vmatprep.subr.bf16.mxu0 0
        %1173 = vmatpush1.bf16.msra.mxu0 0
        %1174 = vmatprep.subr.bf16.mxu0 0
        %1175 = vmatpush1.bf16.msra.mxu0 0
        %1176 = vmatprep.subr.bf16.mxu0 0
        %1177 = vmatpush1.bf16.msra.mxu0 0
        %1178 = vmatprep.subr.bf16.mxu0 0
        %1179 = vmatpush1.bf16.msra.mxu0 %v1163
        %1180 = vmatprep.subr.bf16.mxu0 0
        %1181 = vmatpush1.bf16.msra.mxu0 %v1162
        %1182 = vmatprep.subr.bf16.mxu0 0
        %1183 = vmatpush2.bf16.msra.mxu0 0
        %1184 = vmatprep.subr.bf16.mxu0 0
        %1185 = vmatpush2.bf16.msra.mxu0 0
        %1186 = vmatprep.subr.bf16.mxu0 0
        %1187 = vmatpush2.bf16.msra.mxu0 0
        %1188 = vmatprep.subr.bf16.mxu0 0
        %1189 = vmatpush2.bf16.msra.mxu0 0
        %1190 = vmatprep.subr.bf16.mxu0 0
        %1191 = vmatpush2.bf16.msra.mxu0 0
        %1192 = vmatprep.subr.bf16.mxu0 0
        %1193 = vmatpush2.bf16.msra.mxu0 0
        %1194 = vmatprep.subr.bf16.mxu0 0
        %1195 = vmatpush2.bf16.msra.mxu0 0
        %1196 = vmatprep.subr.bf16.mxu0 0
        %1197 = vmatpush2.bf16.msra.mxu0 0
        %1198 = vmatprep.mubr.bf16.mxu0 0
        %1199 = vmatmul.mubr.bf16.gmra.mxu0 %v1060
        %v1200 = vpop.f32.mrf.mxu0
        %v1201 = vadd.f32 %v1038, %v1200
        %v1202 = vpop.f32.mrf.mxu0
        %v1203 = vpop.f32.mrf.mxu0
        %v1204 = vpop.f32.mrf.mxu0
        %1205 = vdwg.mxu0
        %v1210 = vunpack.c.l.b16 %v1015
        %v1211 = vunpack.c.l.b16 %v1016
        %v1212 = vunpack.c.l.b16 %v1017
        %v1213 = vunpack.c.l.b16 %v1018
        %v1214 = vpack.c.b16 %v1211, %v1210
        %v1215 = vpack.c.b16 %v1213, %v1212
        %1218 = vmatprep.subr.bf16.mxu0 0
        %1219 = vmatpush1.bf16.msra.mxu0 0
        %1220 = vmatprep.subr.bf16.mxu0 0
        %1221 = vmatpush1.bf16.msra.mxu0 0
        %1222 = vmatprep.subr.bf16.mxu0 0
        %1223 = vmatpush1.bf16.msra.mxu0 0
        %1224 = vmatprep.subr.bf16.mxu0 0
        %1225 = vmatpush1.bf16.msra.mxu0 0
        %1226 = vmatprep.subr.bf16.mxu0 0
        %1227 = vmatpush1.bf16.msra.mxu0 0
        %1228 = vmatprep.subr.bf16.mxu0 0
        %1229 = vmatpush1.bf16.msra.mxu0 0
        %1230 = vmatprep.subr.bf16.mxu0 0
        %1231 = vmatpush1.bf16.msra.mxu0 %v1215
        %1232 = vmatprep.subr.bf16.mxu0 0
        %1233 = vmatpush1.bf16.msra.mxu0 %v1214
        %1234 = vmatprep.subr.bf16.mxu0 0
        %1235 = vmatpush2.bf16.msra.mxu0 0
        %1236 = vmatprep.subr.bf16.mxu0 0
        %1237 = vmatpush2.bf16.msra.mxu0 0
        %1238 = vmatprep.subr.bf16.mxu0 0
        %1239 = vmatpush2.bf16.msra.mxu0 0
        %1240 = vmatprep.subr.bf16.mxu0 0
        %1241 = vmatpush2.bf16.msra.mxu0 0
        %1242 = vmatprep.subr.bf16.mxu0 0
        %1243 = vmatpush2.bf16.msra.mxu0 0
        %1244 = vmatprep.subr.bf16.mxu0 0
        %1245 = vmatpush2.bf16.msra.mxu0 0
        %1246 = vmatprep.subr.bf16.mxu0 0
        %1247 = vmatpush2.bf16.msra.mxu0 0
        %1248 = vmatprep.subr.bf16.mxu0 0
        %1249 = vmatpush2.bf16.msra.mxu0 0
        %1250 = vmatprep.mubr.bf16.mxu0 0
        %1251 = vmatmul.mubr.bf16.gmra.mxu0 %v1060
        %v1252 = vpop.f32.mrf.mxu0
        %v1253 = vadd.f32 %v1042, %v1252
        %v1254 = vpop.f32.mrf.mxu0
        %v1255 = vpop.f32.mrf.mxu0
        %v1256 = vpop.f32.mrf.mxu0
        %1257 = vdwg.mxu0
        %v1258 = vpack.c.bf16 %v583, %v583
        %v1259 = vpack.c.bf16 %v635, %v635
        %v1260 = vpack.c.bf16 %v687, %v687
        %v1261 = vpack.c.bf16 %v739, %v739
        %v1262 = vpack.c.bf16 %v840, %v840
        %v1263 = vpack.c.bf16 %v892, %v892
        %v1264 = vpack.c.bf16 %v944, %v944
        %v1265 = vpack.c.bf16 %v996, %v996
        %v1266 = vld [vmem:[%s484] sm:$0xf]
        %v1267 = vunpack.c.l.bf16 %v1266
        %vm1268 = vcmask 64512
        %v1270 = vsel %vm1268, %v1258, 0
        %v1273 = vsel %vm1268, %v1262, 0
        %1275 = vmatprep.subr.bf16.mxu0 0
        %1276 = vmatpush1.bf16.xpose.msra.mxu0 0
        %1277 = vmatprep.subr.bf16.mxu0 0
        %1278 = vmatpush1.bf16.xpose.msra.mxu0 0
        %1279 = vmatprep.subr.bf16.mxu0 0
        %1280 = vmatpush1.bf16.xpose.msra.mxu0 0
        %1281 = vmatprep.subr.bf16.mxu0 0
        %1282 = vmatpush1.bf16.xpose.msra.mxu0 0
        %1283 = vmatprep.subr.bf16.mxu0 0
        %1284 = vmatpush1.bf16.xpose.msra.mxu0 0
        %1285 = vmatprep.subr.bf16.mxu0 0
        %1286 = vmatpush1.bf16.xpose.msra.mxu0 0
        %1287 = vmatprep.subr.bf16.mxu0 0
        %1288 = vmatpush1.bf16.xpose.msra.mxu0 0
        %1289 = vmatprep.subr.bf16.mxu0 0
        %1290 = vmatpush1.bf16.xpose.msra.mxu0 %v1273
        %1291 = vmatprep.subr.bf16.mxu0 0
        %1292 = vmatpush2.bf16.xpose.msra.mxu0 0
        %1293 = vmatprep.subr.bf16.mxu0 0
        %1294 = vmatpush2.bf16.xpose.msra.mxu0 0
        %1295 = vmatprep.subr.bf16.mxu0 0
        %1296 = vmatpush2.bf16.xpose.msra.mxu0 0
        %1297 = vmatprep.subr.bf16.mxu0 0
        %1298 = vmatpush2.bf16.xpose.msra.mxu0 0
        %1299 = vmatprep.subr.bf16.mxu0 0
        %1300 = vmatpush2.bf16.xpose.msra.mxu0 0
        %1301 = vmatprep.subr.bf16.mxu0 0
        %1302 = vmatpush2.bf16.xpose.msra.mxu0 0
        %1303 = vmatprep.subr.bf16.mxu0 0
        %1304 = vmatpush2.bf16.xpose.msra.mxu0 0
        %1305 = vmatprep.subr.bf16.mxu0 0
        %1306 = vmatpush2.bf16.xpose.msra.mxu0 0
        %1307 = vmatprep.mubr.bf16.mxu0 0
        %1308 = vmatmul.mubr.bf16.gmra.mxu0 %v1270
        %v1309 = vpop.f32.mrf.mxu0
        %v1310 = vadd.f32 %v1267, %v1309
        %v1311 = vpop.f32.mrf.mxu0
        %v1312 = vpop.f32.mrf.mxu0
        %v1313 = vpop.f32.mrf.mxu0
        %1314 = vdwg.mxu0
        %v1316 = vsel %vm1268, %v1259, 0
        %v1319 = vsel %vm1268, %v1263, 0
        %1321 = vmatprep.subr.bf16.mxu0 0
        %1322 = vmatpush1.bf16.xpose.msra.mxu0 0
        %1323 = vmatprep.subr.bf16.mxu0 0
        %1324 = vmatpush1.bf16.xpose.msra.mxu0 0
        %1325 = vmatprep.subr.bf16.mxu0 0
        %1326 = vmatpush1.bf16.xpose.msra.mxu0 0
        %1327 = vmatprep.subr.bf16.mxu0 0
        %1328 = vmatpush1.bf16.xpose.msra.mxu0 0
        %1329 = vmatprep.subr.bf16.mxu0 0
        %1330 = vmatpush1.bf16.xpose.msra.mxu0 0
        %1331 = vmatprep.subr.bf16.mxu0 0
        %1332 = vmatpush1.bf16.xpose.msra.mxu0 0
        %1333 = vmatprep.subr.bf16.mxu0 0
        %1334 = vmatpush1.bf16.xpose.msra.mxu0 0
        %1335 = vmatprep.subr.bf16.mxu0 0
        %1336 = vmatpush1.bf16.xpose.msra.mxu0 %v1319
        %1337 = vmatprep.subr.bf16.mxu0 0
        %1338 = vmatpush2.bf16.xpose.msra.mxu0 0
        %1339 = vmatprep.subr.bf16.mxu0 0
        %1340 = vmatpush2.bf16.xpose.msra.mxu0 0
        %1341 = vmatprep.subr.bf16.mxu0 0
        %1342 = vmatpush2.bf16.xpose.msra.mxu0 0
        %1343 = vmatprep.subr.bf16.mxu0 0
        %1344 = vmatpush2.bf16.xpose.msra.mxu0 0
        %1345 = vmatprep.subr.bf16.mxu0 0
        %1346 = vmatpush2.bf16.xpose.msra.mxu0 0
        %1347 = vmatprep.subr.bf16.mxu0 0
        %1348 = vmatpush2.bf16.xpose.msra.mxu0 0
        %1349 = vmatprep.subr.bf16.mxu0 0
        %1350 = vmatpush2.bf16.xpose.msra.mxu0 0
        %1351 = vmatprep.subr.bf16.mxu0 0
        %1352 = vmatpush2.bf16.xpose.msra.mxu0 0
        %1353 = vmatprep.mubr.bf16.mxu0 0
        %1354 = vmatmul.mubr.bf16.gmra.mxu0 %v1316
        %v1355 = vpop.f32.mrf.mxu0
        %v1356 = vadd.f32 %v1267, %v1355
        %v1357 = vpop.f32.mrf.mxu0
        %v1358 = vpop.f32.mrf.mxu0
        %v1359 = vpop.f32.mrf.mxu0
        %1360 = vdwg.mxu0
        %v1362 = vsel %vm1268, %v1260, 0
        %v1365 = vsel %vm1268, %v1264, 0
        %1367 = vmatprep.subr.bf16.mxu0 0
        %1368 = vmatpush1.bf16.xpose.msra.mxu0 0
        %1369 = vmatprep.subr.bf16.mxu0 0
        %1370 = vmatpush1.bf16.xpose.msra.mxu0 0
        %1371 = vmatprep.subr.bf16.mxu0 0
        %1372 = vmatpush1.bf16.xpose.msra.mxu0 0
        %1373 = vmatprep.subr.bf16.mxu0 0
        %1374 = vmatpush1.bf16.xpose.msra.mxu0 0
        %1375 = vmatprep.subr.bf16.mxu0 0
        %1376 = vmatpush1.bf16.xpose.msra.mxu0 0
        %1377 = vmatprep.subr.bf16.mxu0 0
        %1378 = vmatpush1.bf16.xpose.msra.mxu0 0
        %1379 = vmatprep.subr.bf16.mxu0 0
        %1380 = vmatpush1.bf16.xpose.msra.mxu0 0
        %1381 = vmatprep.subr.bf16.mxu0 0
        %1382 = vmatpush1.bf16.xpose.msra.mxu0 %v1365
        %1383 = vmatprep.subr.bf16.mxu0 0
        %1384 = vmatpush2.bf16.xpose.msra.mxu0 0
        %1385 = vmatprep.subr.bf16.mxu0 0
        %1386 = vmatpush2.bf16.xpose.msra.mxu0 0
        %1387 = vmatprep.subr.bf16.mxu0 0
        %1388 = vmatpush2.bf16.xpose.msra.mxu0 0
        %1389 = vmatprep.subr.bf16.mxu0 0
        %1390 = vmatpush2.bf16.xpose.msra.mxu0 0
        %1391 = vmatprep.subr.bf16.mxu0 0
        %1392 = vmatpush2.bf16.xpose.msra.mxu0 0
        %1393 = vmatprep.subr.bf16.mxu0 0
        %1394 = vmatpush2.bf16.xpose.msra.mxu0 0
        %1395 = vmatprep.subr.bf16.mxu0 0
        %1396 = vmatpush2.bf16.xpose.msra.mxu0 0
        %1397 = vmatprep.subr.bf16.mxu0 0
        %1398 = vmatpush2.bf16.xpose.msra.mxu0 0
        %1399 = vmatprep.mubr.bf16.mxu0 0
        %1400 = vmatmul.mubr.bf16.gmra.mxu0 %v1362
        %v1401 = vpop.f32.mrf.mxu0
        %v1402 = vadd.f32 %v1267, %v1401
        %v1403 = vpop.f32.mrf.mxu0
        %v1404 = vpop.f32.mrf.mxu0
        %v1405 = vpop.f32.mrf.mxu0
        %1406 = vdwg.mxu0
        %v1408 = vsel %vm1268, %v1261, 0
        %v1411 = vsel %vm1268, %v1265, 0
        %1413 = vmatprep.subr.bf16.mxu0 0
        %1414 = vmatpush1.bf16.xpose.msra.mxu0 0
        %1415 = vmatprep.subr.bf16.mxu0 0
        %1416 = vmatpush1.bf16.xpose.msra.mxu0 0
        %1417 = vmatprep.subr.bf16.mxu0 0
        %1418 = vmatpush1.bf16.xpose.msra.mxu0 0
        %1419 = vmatprep.subr.bf16.mxu0 0
        %1420 = vmatpush1.bf16.xpose.msra.mxu0 0
        %1421 = vmatprep.subr.bf16.mxu0 0
        %1422 = vmatpush1.bf16.xpose.msra.mxu0 0
        %1423 = vmatprep.subr.bf16.mxu0 0
        %1424 = vmatpush1.bf16.xpose.msra.mxu0 0
        %1425 = vmatprep.subr.bf16.mxu0 0
        %1426 = vmatpush1.bf16.xpose.msra.mxu0 0
        %1427 = vmatprep.subr.bf16.mxu0 0
        %1428 = vmatpush1.bf16.xpose.msra.mxu0 %v1411
        %1429 = vmatprep.subr.bf16.mxu0 0
        %1430 = vmatpush2.bf16.xpose.msra.mxu0 0
        %1431 = vmatprep.subr.bf16.mxu0 0
        %1432 = vmatpush2.bf16.xpose.msra.mxu0 0
        %1433 = vmatprep.subr.bf16.mxu0 0
        %1434 = vmatpush2.bf16.xpose.msra.mxu0 0
        %1435 = vmatprep.subr.bf16.mxu0 0
        %1436 = vmatpush2.bf16.xpose.msra.mxu0 0
        %1437 = vmatprep.subr.bf16.mxu0 0
        %1438 = vmatpush2.bf16.xpose.msra.mxu0 0
        %1439 = vmatprep.subr.bf16.mxu0 0
        %1440 = vmatpush2.bf16.xpose.msra.mxu0 0
        %1441 = vmatprep.subr.bf16.mxu0 0
        %1442 = vmatpush2.bf16.xpose.msra.mxu0 0
        %1443 = vmatprep.subr.bf16.mxu0 0
        %1444 = vmatpush2.bf16.xpose.msra.mxu0 0
        %1445 = vmatprep.mubr.bf16.mxu0 0
        %1446 = vmatmul.mubr.bf16.gmra.mxu0 %v1408
        %v1447 = vpop.f32.mrf.mxu0
        %v1448 = vadd.f32 %v1267, %v1447
        %v1449 = vpop.f32.mrf.mxu0
        %v1450 = vpop.f32.mrf.mxu0
        %v1451 = vpop.f32.mrf.mxu0
        %1452 = vdwg.mxu0
        %v1453 = vsel %vm1268, %v1310, -inf
        %1454 = vmax.xlane.f32.xlu0 %v1453
        %v1455 = vpop.xlane.xlu0 %1454
        %v1456 = vsel %vm1268, %v1356, -inf
        %1457 = vmax.xlane.f32.xlu0 %v1456
        %v1458 = vpop.xlane.xlu0 %1457
        %v1459 = vsel %vm1268, %v1402, -inf
        %1460 = vmax.xlane.f32.xlu0 %v1459
        %v1461 = vpop.xlane.xlu0 %1460
        %v1462 = vsel %vm1268, %v1448, -inf
        %1463 = vmax.xlane.f32.xlu0 %v1462
        %v1464 = vpop.xlane.xlu0 %1463
        %v1465 = vsub.f32 %v1310, %v1455
        %v1466 = vsub.f32 %v1356, %v1458
        %v1467 = vsub.f32 %v1402, %v1461
        %v1468 = vsub.f32 %v1448, %v1464
        %v1469 = vmul.f32 %v1465, 1.442695
        %v1470 = vpow.pop %v1469
        %v1471 = vmul.f32 %v1466, 1.442695
        %v1472 = vpow.pop %v1471
        %v1473 = vmul.f32 %v1467, 1.442695
        %v1474 = vpow.pop %v1473
        %v1475 = vmul.f32 %v1468, 1.442695
        %v1476 = vpow.pop %v1475
        %v1477 = vsel %vm1268, %v1470, 0.0
        %1478 = vadd.xlane.f32.xlu0 %v1477
        %v1479 = vpop.xlane.xlu0 %1478
        %v1480 = vsel %vm1268, %v1472, 0.0
        %1481 = vadd.xlane.f32.xlu0 %v1480
        %v1482 = vpop.xlane.xlu0 %1481
        %v1483 = vsel %vm1268, %v1474, 0.0
        %1484 = vadd.xlane.f32.xlu0 %v1483
        %v1485 = vpop.xlane.xlu0 %1484
        %v1486 = vsel %vm1268, %v1476, 0.0
        %1487 = vadd.xlane.f32.xlu0 %v1486
        %v1488 = vpop.xlane.xlu0 %1487
        %v1489 = vrcp.pop %v1479
        %v1490 = vrcp.pop %v1482
        %v1491 = vrcp.pop %v1485
        %v1492 = vrcp.pop %v1488
        %v1493 = vmul.f32 %v1470, %v1489
        %v1494 = vmul.f32 %v1472, %v1490
        %v1495 = vmul.f32 %v1474, %v1491
        %v1496 = vmul.f32 %v1476, %v1492
        %v1497 = vpack.c.bf16 %v1493, %v1493
        %v1498 = vpack.c.bf16 %v1494, %v1494
        %v1499 = vpack.c.bf16 %v1495, %v1495
        %v1500 = vpack.c.bf16 %v1496, %v1496
        %v1501 = vpack.c.bf16 %v1097, %v1097
        %v1502 = vpack.c.bf16 %v1149, %v1149
        %v1503 = vpack.c.bf16 %v1201, %v1201
        %v1504 = vpack.c.bf16 %v1253, %v1253
        %v1506 = vsel %vm1268, %v1497, 0
        %vm1508 = vcmask 1043456
        %v1510 = vsel %vm1508, %v1501, 0
        %1512 = vmatprep.subr.bf16.mxu0 0
        %1513 = vmatpush1.bf16.msra.mxu0 0
        %1514 = vmatprep.subr.bf16.mxu0 0
        %1515 = vmatpush1.bf16.msra.mxu0 0
        %1516 = vmatprep.subr.bf16.mxu0 0
        %1517 = vmatpush1.bf16.msra.mxu0 0
        %1518 = vmatprep.subr.bf16.mxu0 0
        %1519 = vmatpush1.bf16.msra.mxu0 0
        %1520 = vmatprep.subr.bf16.mxu0 0
        %1521 = vmatpush1.bf16.msra.mxu0 0
        %1522 = vmatprep.subr.bf16.mxu0 0
        %1523 = vmatpush1.bf16.msra.mxu0 0
        %1524 = vmatprep.subr.bf16.mxu0 0
        %1525 = vmatpush1.bf16.msra.mxu0 0
        %1526 = vmatprep.subr.bf16.mxu0 0
        %1527 = vmatpush1.bf16.msra.mxu0 %v1510
        %1528 = vmatprep.subr.bf16.mxu0 0
        %1529 = vmatpush2.bf16.msra.mxu0 0
        %1530 = vmatprep.subr.bf16.mxu0 0
        %1531 = vmatpush2.bf16.msra.mxu0 0
        %1532 = vmatprep.subr.bf16.mxu0 0
        %1533 = vmatpush2.bf16.msra.mxu0 0
        %1534 = vmatprep.subr.bf16.mxu0 0
        %1535 = vmatpush2.bf16.msra.mxu0 0
        %1536 = vmatprep.subr.bf16.mxu0 0
        %1537 = vmatpush2.bf16.msra.mxu0 0
        %1538 = vmatprep.subr.bf16.mxu0 0
        %1539 = vmatpush2.bf16.msra.mxu0 0
        %1540 = vmatprep.subr.bf16.mxu0 0
        %1541 = vmatpush2.bf16.msra.mxu0 0
        %1542 = vmatprep.subr.bf16.mxu0 0
        %1543 = vmatpush2.bf16.msra.mxu0 0
        %1544 = vmatprep.mubr.bf16.mxu0 0
        %1545 = vmatmul.mubr.bf16.gmra.mxu0 %v1506
        %v1546 = vpop.f32.mrf.mxu0
        %v1547 = vadd.f32 0.0, %v1546
        %v1548 = vpop.f32.mrf.mxu0
        %v1549 = vpop.f32.mrf.mxu0
        %v1550 = vpop.f32.mrf.mxu0
        %1551 = vdwg.mxu0
        %v1553 = vsel %vm1268, %v1498, 0
        %v1556 = vsel %vm1508, %v1502, 0
        %1558 = vmatprep.subr.bf16.mxu0 0
        %1559 = vmatpush1.bf16.msra.mxu0 0
        %1560 = vmatprep.subr.bf16.mxu0 0
        %1561 = vmatpush1.bf16.msra.mxu0 0
        %1562 = vmatprep.subr.bf16.mxu0 0
        %1563 = vmatpush1.bf16.msra.mxu0 0
        %1564 = vmatprep.subr.bf16.mxu0 0
        %1565 = vmatpush1.bf16.msra.mxu0 0
        %1566 = vmatprep.subr.bf16.mxu0 0
        %1567 = vmatpush1.bf16.msra.mxu0 0
        %1568 = vmatprep.subr.bf16.mxu0 0
        %1569 = vmatpush1.bf16.msra.mxu0 0
        %1570 = vmatprep.subr.bf16.mxu0 0
        %1571 = vmatpush1.bf16.msra.mxu0 0
        %1572 = vmatprep.subr.bf16.mxu0 0
        %1573 = vmatpush1.bf16.msra.mxu0 %v1556
        %1574 = vmatprep.subr.bf16.mxu0 0
        %1575 = vmatpush2.bf16.msra.mxu0 0
        %1576 = vmatprep.subr.bf16.mxu0 0
        %1577 = vmatpush2.bf16.msra.mxu0 0
        %1578 = vmatprep.subr.bf16.mxu0 0
        %1579 = vmatpush2.bf16.msra.mxu0 0
        %1580 = vmatprep.subr.bf16.mxu0 0
        %1581 = vmatpush2.bf16.msra.mxu0 0
        %1582 = vmatprep.subr.bf16.mxu0 0
        %1583 = vmatpush2.bf16.msra.mxu0 0
        %1584 = vmatprep.subr.bf16.mxu0 0
        %1585 = vmatpush2.bf16.msra.mxu0 0
        %1586 = vmatprep.subr.bf16.mxu0 0
        %1587 = vmatpush2.bf16.msra.mxu0 0
        %1588 = vmatprep.subr.bf16.mxu0 0
        %1589 = vmatpush2.bf16.msra.mxu0 0
        %1590 = vmatprep.mubr.bf16.mxu0 0
        %1591 = vmatmul.mubr.bf16.gmra.mxu0 %v1553
        %v1592 = vpop.f32.mrf.mxu0
        %v1593 = vadd.f32 0.0, %v1592
        %v1594 = vpop.f32.mrf.mxu0
        %v1595 = vpop.f32.mrf.mxu0
        %v1596 = vpop.f32.mrf.mxu0
        %1597 = vdwg.mxu0
        %v1599 = vsel %vm1268, %v1499, 0
        %v1602 = vsel %vm1508, %v1503, 0
        %1604 = vmatprep.subr.bf16.mxu0 0
        %1605 = vmatpush1.bf16.msra.mxu0 0
        %1606 = vmatprep.subr.bf16.mxu0 0
        %1607 = vmatpush1.bf16.msra.mxu0 0
        %1608 = vmatprep.subr.bf16.mxu0 0
        %1609 = vmatpush1.bf16.msra.mxu0 0
        %1610 = vmatprep.subr.bf16.mxu0 0
        %1611 = vmatpush1.bf16.msra.mxu0 0
        %1612 = vmatprep.subr.bf16.mxu0 0
        %1613 = vmatpush1.bf16.msra.mxu0 0
        %1614 = vmatprep.subr.bf16.mxu0 0
        %1615 = vmatpush1.bf16.msra.mxu0 0
        %1616 = vmatprep.subr.bf16.mxu0 0
        %1617 = vmatpush1.bf16.msra.mxu0 0
        %1618 = vmatprep.subr.bf16.mxu0 0
        %1619 = vmatpush1.bf16.msra.mxu0 %v1602
        %1620 = vmatprep.subr.bf16.mxu0 0
        %1621 = vmatpush2.bf16.msra.mxu0 0
        %1622 = vmatprep.subr.bf16.mxu0 0
        %1623 = vmatpush2.bf16.msra.mxu0 0
        %1624 = vmatprep.subr.bf16.mxu0 0
        %1625 = vmatpush2.bf16.msra.mxu0 0
        %1626 = vmatprep.subr.bf16.mxu0 0
        %1627 = vmatpush2.bf16.msra.mxu0 0
        %1628 = vmatprep.subr.bf16.mxu0 0
        %1629 = vmatpush2.bf16.msra.mxu0 0
        %1630 = vmatprep.subr.bf16.mxu0 0
        %1631 = vmatpush2.bf16.msra.mxu0 0
        %1632 = vmatprep.subr.bf16.mxu0 0
        %1633 = vmatpush2.bf16.msra.mxu0 0
        %1634 = vmatprep.subr.bf16.mxu0 0
        %1635 = vmatpush2.bf16.msra.mxu0 0
        %1636 = vmatprep.mubr.bf16.mxu0 0
        %1637 = vmatmul.mubr.bf16.gmra.mxu0 %v1599
        %v1638 = vpop.f32.mrf.mxu0
        %v1639 = vadd.f32 0.0, %v1638
        %v1640 = vpop.f32.mrf.mxu0
        %v1641 = vpop.f32.mrf.mxu0
        %v1642 = vpop.f32.mrf.mxu0
        %1643 = vdwg.mxu0
        %v1645 = vsel %vm1268, %v1500, 0
        %v1648 = vsel %vm1508, %v1504, 0
        %1650 = vmatprep.subr.bf16.mxu0 0
        %1651 = vmatpush1.bf16.msra.mxu0 0
        %1652 = vmatprep.subr.bf16.mxu0 0
        %1653 = vmatpush1.bf16.msra.mxu0 0
        %1654 = vmatprep.subr.bf16.mxu0 0
        %1655 = vmatpush1.bf16.msra.mxu0 0
        %1656 = vmatprep.subr.bf16.mxu0 0
        %1657 = vmatpush1.bf16.msra.mxu0 0
        %1658 = vmatprep.subr.bf16.mxu0 0
        %1659 = vmatpush1.bf16.msra.mxu0 0
        %1660 = vmatprep.subr.bf16.mxu0 0
        %1661 = vmatpush1.bf16.msra.mxu0 0
        %1662 = vmatprep.subr.bf16.mxu0 0
        %1663 = vmatpush1.bf16.msra.mxu0 0
        %1664 = vmatprep.subr.bf16.mxu0 0
        %1665 = vmatpush1.bf16.msra.mxu0 %v1648
        %1666 = vmatprep.subr.bf16.mxu0 0
        %1667 = vmatpush2.bf16.msra.mxu0 0
        %1668 = vmatprep.subr.bf16.mxu0 0
        %1669 = vmatpush2.bf16.msra.mxu0 0
        %1670 = vmatprep.subr.bf16.mxu0 0
        %1671 = vmatpush2.bf16.msra.mxu0 0
        %1672 = vmatprep.subr.bf16.mxu0 0
        %1673 = vmatpush2.bf16.msra.mxu0 0
        %1674 = vmatprep.subr.bf16.mxu0 0
        %1675 = vmatpush2.bf16.msra.mxu0 0
        %1676 = vmatprep.subr.bf16.mxu0 0
        %1677 = vmatpush2.bf16.msra.mxu0 0
        %1678 = vmatprep.subr.bf16.mxu0 0
        %1679 = vmatpush2.bf16.msra.mxu0 0
        %1680 = vmatprep.subr.bf16.mxu0 0
        %1681 = vmatpush2.bf16.msra.mxu0 0
        %1682 = vmatprep.mubr.bf16.mxu0 0
        %1683 = vmatmul.mubr.bf16.gmra.mxu0 %v1645
        %v1684 = vpop.f32.mrf.mxu0
        %v1685 = vadd.f32 0.0, %v1684
        %v1686 = vpop.f32.mrf.mxu0
        %v1687 = vpop.f32.mrf.mxu0
        %v1688 = vpop.f32.mrf.mxu0
        %1689 = vdwg.mxu0
        %v1690 = vpack.c.bf16 %v1547, %v1547
        %v1691 = vpack.c.bf16 %v1593, %v1593
        %v1692 = vpack.c.bf16 %v1639, %v1639
        %v1693 = vpack.c.bf16 %v1685, %v1685
        %v1694 = vld [vmem:[%s10] sm:$0xf]
        %v1695 = vld [vmem:[%s10 + $0x4] sm:$0xf]
        %v1696 = vld [vmem:[%s10 + $0x8] sm:$0xf]
        %v1697 = vld [vmem:[%s10 + $0xc] sm:$0xf]
        %v1699 = vsel %vm1268, %v1690, 0
        %v1702 = vsel %vm1508, %v1694, 0
        %1704 = vmatprep.subr.bf16.mxu0 0
        %1705 = vmatpush1.bf16.msra.mxu0 0
        %1706 = vmatprep.subr.bf16.mxu0 0
        %1707 = vmatpush1.bf16.msra.mxu0 0
        %1708 = vmatprep.subr.bf16.mxu0 0
        %1709 = vmatpush1.bf16.msra.mxu0 0
        %1710 = vmatprep.subr.bf16.mxu0 0
        %1711 = vmatpush1.bf16.msra.mxu0 0
        %1712 = vmatprep.subr.bf16.mxu0 0
        %1713 = vmatpush1.bf16.msra.mxu0 0
        %1714 = vmatprep.subr.bf16.mxu0 0
        %1715 = vmatpush1.bf16.msra.mxu0 0
        %1716 = vmatprep.subr.bf16.mxu0 0
        %1717 = vmatpush1.bf16.msra.mxu0 0
        %1718 = vmatprep.subr.bf16.mxu0 0
        %1719 = vmatpush1.bf16.msra.mxu0 %v1702
        %1720 = vmatprep.subr.bf16.mxu0 0
        %1721 = vmatpush2.bf16.msra.mxu0 0
        %1722 = vmatprep.subr.bf16.mxu0 0
        %1723 = vmatpush2.bf16.msra.mxu0 0
        %1724 = vmatprep.subr.bf16.mxu0 0
        %1725 = vmatpush2.bf16.msra.mxu0 0
        %1726 = vmatprep.subr.bf16.mxu0 0
        %1727 = vmatpush2.bf16.msra.mxu0 0
        %1728 = vmatprep.subr.bf16.mxu0 0
        %1729 = vmatpush2.bf16.msra.mxu0 0
        %1730 = vmatprep.subr.bf16.mxu0 0
        %1731 = vmatpush2.bf16.msra.mxu0 0
        %1732 = vmatprep.subr.bf16.mxu0 0
        %1733 = vmatpush2.bf16.msra.mxu0 0
        %1734 = vmatprep.subr.bf16.mxu0 0
        %1735 = vmatpush2.bf16.msra.mxu0 0
        %1736 = vmatprep.mubr.bf16.mxu0 0
        %1737 = vmatmul.mubr.bf16.gmra.mxu0 %v1699
        %v1738 = vpop.f32.mrf.mxu0
        %v1739 = vadd.f32 0.0, %v1738
        %v1740 = vpop.f32.mrf.mxu0
        %v1741 = vpop.f32.mrf.mxu0
        %v1742 = vpop.f32.mrf.mxu0
        %1743 = vdwg.mxu0
        %v1745 = vsel %vm1268, %v1691, 0
        %v1748 = vsel %vm1508, %v1695, 0
        %1750 = vmatprep.subr.bf16.mxu0 0
        %1751 = vmatpush1.bf16.msra.mxu0 0
        %1752 = vmatprep.subr.bf16.mxu0 0
        %1753 = vmatpush1.bf16.msra.mxu0 0
        %1754 = vmatprep.subr.bf16.mxu0 0
        %1755 = vmatpush1.bf16.msra.mxu0 0
        %1756 = vmatprep.subr.bf16.mxu0 0
        %1757 = vmatpush1.bf16.msra.mxu0 0
        %1758 = vmatprep.subr.bf16.mxu0 0
        %1759 = vmatpush1.bf16.msra.mxu0 0
        %1760 = vmatprep.subr.bf16.mxu0 0
        %1761 = vmatpush1.bf16.msra.mxu0 0
        %1762 = vmatprep.subr.bf16.mxu0 0
        %1763 = vmatpush1.bf16.msra.mxu0 0
        %1764 = vmatprep.subr.bf16.mxu0 0
        %1765 = vmatpush1.bf16.msra.mxu0 %v1748
        %1766 = vmatprep.subr.bf16.mxu0 0
        %1767 = vmatpush2.bf16.msra.mxu0 0
        %1768 = vmatprep.subr.bf16.mxu0 0
        %1769 = vmatpush2.bf16.msra.mxu0 0
        %1770 = vmatprep.subr.bf16.mxu0 0
        %1771 = vmatpush2.bf16.msra.mxu0 0
        %1772 = vmatprep.subr.bf16.mxu0 0
        %1773 = vmatpush2.bf16.msra.mxu0 0
        %1774 = vmatprep.subr.bf16.mxu0 0
        %1775 = vmatpush2.bf16.msra.mxu0 0
        %1776 = vmatprep.subr.bf16.mxu0 0
        %1777 = vmatpush2.bf16.msra.mxu0 0
        %1778 = vmatprep.subr.bf16.mxu0 0
        %1779 = vmatpush2.bf16.msra.mxu0 0
        %1780 = vmatprep.subr.bf16.mxu0 0
        %1781 = vmatpush2.bf16.msra.mxu0 0
        %1782 = vmatprep.mubr.bf16.mxu0 0
        %1783 = vmatmul.mubr.bf16.gmra.mxu0 %v1745
        %v1784 = vpop.f32.mrf.mxu0
        %v1785 = vadd.f32 0.0, %v1784
        %v1786 = vpop.f32.mrf.mxu0
        %v1787 = vpop.f32.mrf.mxu0
        %v1788 = vpop.f32.mrf.mxu0
        %1789 = vdwg.mxu0
        %v1791 = vsel %vm1268, %v1692, 0
        %v1794 = vsel %vm1508, %v1696, 0
        %1796 = vmatprep.subr.bf16.mxu0 0
        %1797 = vmatpush1.bf16.msra.mxu0 0
        %1798 = vmatprep.subr.bf16.mxu0 0
        %1799 = vmatpush1.bf16.msra.mxu0 0
        %1800 = vmatprep.subr.bf16.mxu0 0
        %1801 = vmatpush1.bf16.msra.mxu0 0
        %1802 = vmatprep.subr.bf16.mxu0 0
        %1803 = vmatpush1.bf16.msra.mxu0 0
        %1804 = vmatprep.subr.bf16.mxu0 0
        %1805 = vmatpush1.bf16.msra.mxu0 0
        %1806 = vmatprep.subr.bf16.mxu0 0
        %1807 = vmatpush1.bf16.msra.mxu0 0
        %1808 = vmatprep.subr.bf16.mxu0 0
        %1809 = vmatpush1.bf16.msra.mxu0 0
        %1810 = vmatprep.subr.bf16.mxu0 0
        %1811 = vmatpush1.bf16.msra.mxu0 %v1794
        %1812 = vmatprep.subr.bf16.mxu0 0
        %1813 = vmatpush2.bf16.msra.mxu0 0
        %1814 = vmatprep.subr.bf16.mxu0 0
        %1815 = vmatpush2.bf16.msra.mxu0 0
        %1816 = vmatprep.subr.bf16.mxu0 0
        %1817 = vmatpush2.bf16.msra.mxu0 0
        %1818 = vmatprep.subr.bf16.mxu0 0
        %1819 = vmatpush2.bf16.msra.mxu0 0
        %1820 = vmatprep.subr.bf16.mxu0 0
        %1821 = vmatpush2.bf16.msra.mxu0 0
        %1822 = vmatprep.subr.bf16.mxu0 0
        %1823 = vmatpush2.bf16.msra.mxu0 0
        %1824 = vmatprep.subr.bf16.mxu0 0
        %1825 = vmatpush2.bf16.msra.mxu0 0
        %1826 = vmatprep.subr.bf16.mxu0 0
        %1827 = vmatpush2.bf16.msra.mxu0 0
        %1828 = vmatprep.mubr.bf16.mxu0 0
        %1829 = vmatmul.mubr.bf16.gmra.mxu0 %v1791
        %v1830 = vpop.f32.mrf.mxu0
        %v1831 = vadd.f32 0.0, %v1830
        %v1832 = vpop.f32.mrf.mxu0
        %v1833 = vpop.f32.mrf.mxu0
        %v1834 = vpop.f32.mrf.mxu0
        %1835 = vdwg.mxu0
        %v1837 = vsel %vm1268, %v1693, 0
        %v1840 = vsel %vm1508, %v1697, 0
        %1842 = vmatprep.subr.bf16.mxu0 0
        %1843 = vmatpush1.bf16.msra.mxu0 0
        %1844 = vmatprep.subr.bf16.mxu0 0
        %1845 = vmatpush1.bf16.msra.mxu0 0
        %1846 = vmatprep.subr.bf16.mxu0 0
        %1847 = vmatpush1.bf16.msra.mxu0 0
        %1848 = vmatprep.subr.bf16.mxu0 0
        %1849 = vmatpush1.bf16.msra.mxu0 0
        %1850 = vmatprep.subr.bf16.mxu0 0
        %1851 = vmatpush1.bf16.msra.mxu0 0
        %1852 = vmatprep.subr.bf16.mxu0 0
        %1853 = vmatpush1.bf16.msra.mxu0 0
        %1854 = vmatprep.subr.bf16.mxu0 0
        %1855 = vmatpush1.bf16.msra.mxu0 0
        %1856 = vmatprep.subr.bf16.mxu0 0
        %1857 = vmatpush1.bf16.msra.mxu0 %v1840
        %1858 = vmatprep.subr.bf16.mxu0 0
        %1859 = vmatpush2.bf16.msra.mxu0 0
        %1860 = vmatprep.subr.bf16.mxu0 0
        %1861 = vmatpush2.bf16.msra.mxu0 0
        %1862 = vmatprep.subr.bf16.mxu0 0
        %1863 = vmatpush2.bf16.msra.mxu0 0
        %1864 = vmatprep.subr.bf16.mxu0 0
        %1865 = vmatpush2.bf16.msra.mxu0 0
        %1866 = vmatprep.subr.bf16.mxu0 0
        %1867 = vmatpush2.bf16.msra.mxu0 0
        %1868 = vmatprep.subr.bf16.mxu0 0
        %1869 = vmatpush2.bf16.msra.mxu0 0
        %1870 = vmatprep.subr.bf16.mxu0 0
        %1871 = vmatpush2.bf16.msra.mxu0 0
        %1872 = vmatprep.subr.bf16.mxu0 0
        %1873 = vmatpush2.bf16.msra.mxu0 0
        %1874 = vmatprep.mubr.bf16.mxu0 0
        %1875 = vmatmul.mubr.bf16.gmra.mxu0 %v1837
        %v1876 = vpop.f32.mrf.mxu0
        %v1877 = vadd.f32 0.0, %v1876
        %v1878 = vpop.f32.mrf.mxu0
        %v1879 = vpop.f32.mrf.mxu0
        %v1880 = vpop.f32.mrf.mxu0
        %1881 = vdwg.mxu0
        %v1882 = vsel %vm544, %v1739, 0.0
        %v1883 = vsel %vm544, %v1785, 0.0
        %v1884 = vadd.f32 %v1882, %v1883
        %v1885 = vsel %vm544, %v1831, 0.0
        %v1886 = vadd.f32 %v1884, %v1885
        %v1887 = vsel %vm544, %v1877, 0.0
        %v1888 = vadd.f32 %v1886, %v1887
        %v1889 = vld [vmem:[%s11] sm:$0x1]
        %v1891 = vlaneseq
        %v1892 = vshrl.u32 %v1891, 7
        %v1893 = vsub.s32 0, %v1892
        %v1894 = vrot.slane %v1889, %v1893
        %v1896 = vadd.f32 %v1888, %v1894
        %1897 = vst.msk [vmem:[%s465] sm:$0xff] %vm544, %v1896
        %s1898 = sand.u32 %s322, 1
        %s1899 = scalar_lea.sflag [#allocation3], %s1898
        %s1900 = sand.u32 %s322, 1
        %s1901 = smul.addr %s1900, 8
        %s1902 = scalar_lea.vmem [#allocation2], %s1901
        // Predicated region
        $region69: #{tpu_custom_call.1} parent=67 // pred_check
          %p1903 = pneg %p332
        $region70: #{tpu_custom_call.1} parent=67 // pred_check_branch
          %1905 = sbr.rel (%p1903) target = $region72
        $region71: #{tpu_custom_call.1} parent=67 // pred_region
          %s1907 = ssub.s32 128, 128
          %1908 = vsyncadd %s1899, %s1907
          %s1909 = sadd.s32 %s31, %s30
          %s1910 = smul.addr %s1909, 128
          %s1911 = scalar_lea.hbm %s12, %s1910
          %s1913 = sshll.u32 %s1902, 4
          %s1914 = int_to_ptr.vmem [resolvable:$true] %s1913
          %1916 = dma.vmem_to_hbm [thread:$0]  %s1914, 128, %s1911, %s1899
        $region72: #{tpu_custom_call.1} parent=67 // pred_fallthru
          _
      $region68: #{tpu_custom_call.1} parent=5 // pred_fallthru
        _
      %p1917 = scmp.le.s32.totalorder 2, %s21
      // Predicated region
      $region73: #{tpu_custom_call.1} parent=5 // pred_check
        %p1918 = pneg %p1917
      $region74: #{tpu_custom_call.1} parent=5 // pred_check_branch
        %1920 = sbr.rel (%p1918) target = $region76
      $region75: #{tpu_custom_call.1} parent=5 // pred_region
        %s1921 = ssub.s32 %s21, 2
        // Predicated region
        $region77: #{tpu_custom_call.1} parent=75 // pred_check
          %p1922 = pneg %p338
        $region78: #{tpu_custom_call.1} parent=75 // pred_check_branch
          %1924 = sbr.rel (%p1922) target = $region80
        $region79: #{tpu_custom_call.1} parent=75 // pred_region
          %s1925 = sand.u32 %s323, 1
          %s1926 = scalar_lea.sflag [#allocation3], %s1925
          %s1927 = sand.u32 %s323, 1
          %s1928 = smul.addr %s1927, 8
          %s1929 = scalar_lea.vmem [#allocation2], %s1928
          %1930 = dma.done %s1926, 128
        $region80: #{tpu_custom_call.1} parent=75 // pred_fallthru
          _
      $region76: #{tpu_custom_call.1} parent=5 // pred_fallthru
        _
    $region6: #{tpu_custom_call.1} parent=1 // loop_footer
      %s25 = sadd.s32 1, %s21
    $region7: #{tpu_custom_call.1} parent=1 // loop_footer_branch
      %20 = sbr.rel target = $region3
    $region8: #{tpu_custom_call.1} parent=1 // loop_exit
      _
    %1931 = vsyncpa [#allocation3], 1
    %s1932 = scalar_lea.sflag [#allocation3], 1
    %1933 = vsyncpa %s1932, 1

</llo_original>
